<compile_context>
chip_gen: v6e
topology: v6e:2x2x1
jax: 0.10.0
libtpu: 0.0.40
codegen_flags: <defaults>
</compile_context>

<pallas_src>
import functools

import jax
import jax.numpy as jnp
from jax import lax
from jax.experimental import pallas as pl
from jax.experimental.pallas import tpu as pltpu

LN_EPS = 1e-5
BN_EPS = 1e-5
_INV_SQRT2 = 0.7071067811865476


def _dwconv_into(out_ref, inp, w, b, K):
    """Depthwise KxK 'SAME' (zero-pad) conv accumulated into an f32 ref.

    out_ref: (bb, H, W, C) float32 ref (VMEM scratch or f32 output block).
    inp:     (bb, H, W, C) float32 value (C = lanes, W = sublanes).
    w:       (K*K, C) flattened taps; tap (dy, dx) lives at row dy*K + dx.
    b:       (1, C) bias.
    """
    bb, H, W, C = inp.shape
    P = K // 2

    # W-direction taps: unmasked XLU sublane rolls; the edge-validity mask is
    # folded into a tiny per-(dy,dx) weight plane so no per-element select.
    col = lax.broadcasted_iota(jnp.int32, (1, 1, W, C), 2)
    cols, valid = [], []
    for dx in range(K):
        d = dx - P
        if d == 0:
            cols.append(inp)
            valid.append(None)
        else:
            # cols[dx][..., w, :] = inp[..., w + d, :]
            cols.append(pltpu.roll(inp, shift=(-d) % W, axis=2))
            valid.append(((col >= -d) & (col < W - d)).astype(jnp.float32))

    def row_sum(dy):
        r = None
        for dx in range(K):
            wp = w[dy * K + dx].reshape(1, 1, 1, C)
            if valid[dx] is not None:
                wp = wp * valid[dx]            # masked weight plane, (1,1,W,C)
            term = cols[dx] * wp
            r = term if r is None else r + term
        return r

    # Center row first: fully initializes the output block (and carries bias).
    out_ref[...] = row_sum(P) + b
    # Off-center rows: add only the valid H rows via static major-dim slices
    # (no shifted copies, no zero-row adds).
    for dy in range(K):
        e = dy - P
        if e == 0:
            continue
        r = row_sum(dy)
        if e > 0:
            out_ref[:, :H - e] += r[:, e:]
        else:
            out_ref[:, -e:] += r[:, :H + e]


def lpi_pass1_kernel(x_ref, ln_g_ref, ln_b_ref, w1_ref, b1_ref,
                     y_ref, stats_ref, acc_ref, *, K):
    bb, H, W, C = x_ref.shape
    N = bb * H * W

    # ---- LayerNorm over channels (lane dim).  The reductions are routed to
    # the otherwise-idle MXU (matmul with a ones vector) so the XLU stays
    # free for the conv rolls.
    x2d = x_ref[...].astype(jnp.float32).reshape(N, C)
    ones_c = jnp.ones((C, 1), jnp.float32)
    inv_c = jnp.float32(1.0 / C)
    mu = jnp.dot(x2d, ones_c, preferred_element_type=jnp.float32) * inv_c        # (N, 1)
    ex2 = jnp.dot(x2d * x2d, ones_c, preferred_element_type=jnp.float32) * inv_c  # (N, 1)
    var = ex2 - mu * mu
    xn = (x2d - mu) * lax.rsqrt(var + LN_EPS)
    xn = (xn * ln_g_ref[...] + ln_b_ref[...]).reshape(bb, H, W, C)

    # ---- Depthwise conv #1, accumulated in f32 into the VMEM scratch.
    _dwconv_into(acc_ref, xn, w1_ref[...], b1_ref[...], K)
    y = acc_ref[...]
    y_ref[...] = y.astype(y_ref.dtype)   # bf16 on the HBM round-trip by default

    # ---- Per-tile partial BatchNorm statistics (per-channel sum / sum-sq),
    # reduced on the MXU from the *f32* accumulator, emitted with one store.
    y2d = y.reshape(N, C)
    ones_n = jnp.ones((1, N), jnp.float32)
    s = jnp.dot(ones_n, y2d, preferred_element_type=jnp.float32)           # (1, C)
    ss = jnp.dot(ones_n, y2d * y2d, preferred_element_type=jnp.float32)    # (1, C)
    stats_ref[...] = jnp.concatenate([s, ss], axis=0).reshape(1, 2, C)


def lpi_pass2_kernel(y_ref, stats_ref, bn_g_ref, bn_b_ref, w2_ref, b2_ref,
                     o_ref, *, K, n_total):
    # ---- Finalize BatchNorm batch statistics in-kernel (tiny O(C) work per
    # step; removes the host/XLA bubble between the two pallas_calls).
    # NOTE: E[y^2]-E[y]^2 from f32 partial sums; fine at these magnitudes but
    # Chan/Welford merging would be preferable for very large activations.
    inv_n = jnp.float32(1.0 / n_total)
    total = jnp.sum(stats_ref[...], axis=0)          # (2, C)
    mean = total[0:1] * inv_n
    var = total[1:2] * inv_n - mean * mean           # biased (training-mode BN)
    # TODO(synk): PyTorch BatchNorm2d's running_mean/running_var in-place
    # update is a stateful side effect and is not reproduced here.
    scale = bn_g_ref[...] * lax.rsqrt(var + BN_EPS)
    shift = bn_b_ref[...] - mean * scale

    y = y_ref[...].astype(jnp.float32)
    y = y * scale + shift
    # Exact GELU (erf form, matches nn.GELU's default).
    y = 0.5 * y * (1.0 + lax.erf(y * jnp.float32(_INV_SQRT2)))

    # ---- Depthwise conv #2, accumulated straight into the f32 output block.
    _dwconv_into(o_ref, y, w2_ref[...], b2_ref[...], K)


def _vmem_budget_bytes():
    """~75% of this generation's per-core VMEM (64 MiB v7x, 128 MiB v5e/v6e)."""
    try:
        cap = pltpu.get_tpu_info().vmem_capacity_bytes
    except Exception:
        cap = 64 << 20
    return int(cap) * 3 // 4


def _pick_block_b(B, H, W, C, vmem_budget):
    """Largest batch tile that (a) keeps the ~12x-tile live set inside the VMEM
    budget, (b) targets ~2 MiB tiles (HBM-roofline sweet spot) and (c) leaves
    >= 4 grid steps for pipelining / v7x megacore when the batch allows it."""
    bytes_per_b = H * W * C * 4
    cap = max(1, min(vmem_budget // (12 * bytes_per_b),
                     (2 << 20) // bytes_per_b,
                     B))
    min_steps = min(4, B)
    divs = [d for d in range(1, B + 1) if B % d == 0 and d <= cap]
    good = [d for d in divs if B // d >= min_steps]
    return max(good) if good else max(divs)


def local_patch_interaction(x, params, kernel_size=3, block_b=None,
                            intermediate_dtype=jnp.bfloat16):
    ln_g, ln_b, w1, b1, bn_g, bn_b, w2, b2 = params
    B, H, W, C = x.shape
    K = kernel_size
    KK = K * K
    assert K % 2 == 1 and W >= K and H >= K

    vmem_budget = _vmem_budget_bytes()
    if block_b is None:
        block_b = _pick_block_b(B, H, W, C, vmem_budget)
    assert B % block_b == 0, "batch must be divisible by the batch tile"
    nb = B // block_b

    row = lambda v: v.reshape(1, C).astype(jnp.float32)
    w1f = w1.reshape(KK, C).astype(jnp.float32)
    w2f = w2.reshape(KK, C).astype(jnp.float32)

    # Batch-tiled activations; per-channel params / weights / stats always map
    # to block 0 so they stay resident in VMEM across the whole grid.
    tile = pl.BlockSpec((block_b, H, W, C), lambda i: (i, 0, 0, 0))
    chan = pl.BlockSpec((1, C), lambda i: (0, 0))
    wsp = pl.BlockSpec((KK, C), lambda i: (0, 0))
    stats_out = pl.BlockSpec((1, 2, C), lambda i: (i, 0, 0))
    stats_in = pl.BlockSpec((nb, 2, C), lambda i: (0, 0, 0))

    cparams = pltpu.CompilerParams(
        dimension_semantics=("parallel",),   # shard batch tiles across v7x's 2 TCs
        vmem_limit_bytes=vmem_budget)

    # ---- pass 1: LayerNorm -> depthwise conv1 + per-tile BN partial stats ----
    y, stats = pl.pallas_call(
        functools.partial(lpi_pass1_kernel, K=K),
        grid=(nb,),
        in_specs=[tile, chan, chan, wsp, chan],
        out_specs=[tile, stats_out],
        out_shape=[jax.ShapeDtypeStruct((B, H, W, C), intermediate_dtype),
                   jax.ShapeDtypeStruct((nb, 2, C), jnp.float32)],
        scratch_shapes=[pltpu.VMEM((block_b, H, W, C), jnp.float32)],
        compiler_params=cparams,
    )(x, row(ln_g), row(ln_b), w1f, row(b1))

    # ---- pass 2: BN finalize (in-kernel) -> affine -> GELU -> depthwise conv2 ----
    out = pl.pallas_call(
        functools.partial(lpi_pass2_kernel, K=K, n_total=B * H * W),
        grid=(nb,),
        in_specs=[tile, stats_in, chan, chan, wsp, chan],
        out_specs=tile,
        out_shape=jax.ShapeDtypeStruct((B, H, W, C), jnp.float32),
        compiler_params=cparams,
    )(y, stats, row(bn_g), row(bn_b), w2f, row(b2))
    return out


def reference(x, params, kernel_size=3):
    """Pure-JAX reference of the PyTorch forward pass (channels-last)."""
    ln_g, ln_b, w1, b1, bn_g, bn_b, w2, b2 = params
    B, H, W, C = x.shape
    K = kernel_size

    mu = x.mean(-1, keepdims=True)
    var = ((x - mu) ** 2).mean(-1, keepdims=True)
    xn = (x - mu) / jnp.sqrt(var + LN_EPS) * ln_g + ln_b

    def dw(inp, w, b):
        out = lax.conv_general_dilated(
            inp, w.reshape(K, K, 1, C),
            window_strides=(1, 1), padding="SAME",
            dimension_numbers=("NHWC", "HWIO", "NHWC"),
            feature_group_count=C)
        return out + b

    y = dw(xn, w1, b1)
    bmu = y.mean(axis=(0, 1, 2), keepdims=True)
    bvar = ((y - bmu) ** 2).mean(axis=(0, 1, 2), keepdims=True)
    y = (y - bmu) / jnp.sqrt(bvar + BN_EPS) * bn_g + bn_b
    y = jax.nn.gelu(y, approximate=False)
    return dw(y, w2, b2)


def make_params(key, dim, kernel_size=3):
    ks = jax.random.split(key, 8)
    s = 0.1
    ln_g = 1.0 + s * jax.random.normal(ks[0], (dim,), jnp.float32)
    ln_b = s * jax.random.normal(ks[1], (dim,), jnp.float32)
    w1 = s * jax.random.normal(ks[2], (kernel_size, kernel_size, dim), jnp.float32)
    b1 = s * jax.random.normal(ks[3], (dim,), jnp.float32)
    bn_g = 1.0 + s * jax.random.normal(ks[4], (dim,), jnp.float32)
    bn_b = s * jax.random.normal(ks[5], (dim,), jnp.float32)
    w2 = s * jax.random.normal(ks[6], (kernel_size, kernel_size, dim), jnp.float32)
    b2 = s * jax.random.normal(ks[7], (dim,), jnp.float32)
    return (ln_g, ln_b, w1, b1, bn_g, bn_b, w2, b2)


if __name__ == "__main__":
    # Lane-dense demo shapes: C=128 fills all lanes, W=16 fills sublanes.
    B, H, W, C = 2, 16, 16, 128
    kernel_size = 3

    key = jax.random.PRNGKey(0)
    kx, kp = jax.random.split(key)
    x = jax.random.normal(kx, (B, H, W, C), jnp.float32)
    params = make_params(kp, C, kernel_size)

    ref = jax.block_until_ready(reference(x, params, kernel_size))

    # Exactness check with an f32 inter-pass intermediate.
    out_f32 = jax.block_until_ready(
        local_patch_interaction(x, params, kernel_size,
                                intermediate_dtype=jnp.float32))
    assert out_f32.shape == (B, H, W, C)
    assert jnp.allclose(out_f32, ref, atol=1e-4, rtol=1e-4), \
        float(jnp.max(jnp.abs(out_f32 - ref)))

    # Default (fast) path: bf16 inter-pass intermediate halves y's HBM traffic;
    # loosened tolerance reflects the explicit bf16 quantization at that boundary.
    out = jax.block_until_ready(local_patch_interaction(x, params, kernel_size))
    assert out.shape == (B, H, W, C)
    assert jnp.allclose(out, ref, atol=2e-2, rtol=2e-2), \
        float(jnp.max(jnp.abs(out - ref)))

    print("KERNEL_OK")
</pallas_src>

<mosaic_0001>
module attributes {stable_mosaic.version = 11 : i64} {
  func.func @lpi_pass1_kernel(%arg0: i32, %arg1: memref<1x16x16x128xf32, #tpu.memory_space<vmem>>, %arg2: memref<1x128xf32, #tpu.memory_space<vmem>>, %arg3: memref<1x128xf32, #tpu.memory_space<vmem>>, %arg4: memref<9x128xf32, #tpu.memory_space<vmem>>, %arg5: memref<1x128xf32, #tpu.memory_space<vmem>>, %arg6: memref<1x16x16x128xf32, #tpu.memory_space<vmem>>, %arg7: memref<1x2x128xf32, #tpu.memory_space<vmem>>, %arg8: memref<1x16x16x128xf32, #tpu.memory_space<vmem>>) attributes {dimension_semantics = [#tpu.dimension_semantics<parallel>], iteration_bounds = array<i64: 2>, scalar_prefetch = 0 : i64, scratch_operands = 1 : i64, tpu.core_type = #tpu.core_type<tc>, window_params = [{transform_indices = @transform_0, window_bounds = array<i64: 1, 16, 16, 128>}, {pipeline_mode = #tpu.pipeline_mode<synchronous>, transform_indices = @transform_1, window_bounds = array<i64: 1, 128>}, {pipeline_mode = #tpu.pipeline_mode<synchronous>, transform_indices = @transform_2, window_bounds = array<i64: 1, 128>}, {pipeline_mode = #tpu.pipeline_mode<synchronous>, transform_indices = @transform_3, window_bounds = array<i64: 9, 128>}, {pipeline_mode = #tpu.pipeline_mode<synchronous>, transform_indices = @transform_4, window_bounds = array<i64: 1, 128>}, {transform_indices = @transform_5, window_bounds = array<i64: 1, 16, 16, 128>}, {transform_indices = @transform_6, window_bounds = array<i64: 1, 2, 128>}]} {
    %c0 = arith.constant 0 : index
    %c0_0 = arith.constant 0 : index
    %c0_1 = arith.constant 0 : index
    %c0_2 = arith.constant 0 : index
    %0 = vector.load %arg1[%c0, %c0_0, %c0_1, %c0_2] : memref<1x16x16x128xf32, #tpu.memory_space<vmem>>, vector<1x16x16x128xf32>
    %1 = vector.shape_cast %0 : vector<1x16x16x128xf32> to vector<256x128xf32>
    %cst = arith.constant 1.000000e+00 : f32
    %2 = vector.broadcast %cst : f32 to vector<128x1xf32>
    %cst_3 = arith.constant dense<0.000000e+00> : vector<256x1xf32>
    %3 = tpu.matmul %1, %2, %cst_3 {dimension_numbers = #tpu.dot_dimension_numbers<[1], [0], [0], [1], [0, 0, 1, 1], [], []>} : vector<256x128xf32>, vector<128x1xf32>, vector<256x1xf32> -> vector<256x1xf32>
    %cst_4 = arith.constant 7.812500e-03 : f32
    %4 = vector.broadcast %cst_4 : f32 to vector<256x1xf32>
    %5 = arith.mulf %3, %4 : vector<256x1xf32>
    %6 = arith.mulf %1, %1 : vector<256x128xf32>
    %cst_5 = arith.constant dense<0.000000e+00> : vector<256x1xf32>
    %7 = tpu.matmul %6, %2, %cst_5 {dimension_numbers = #tpu.dot_dimension_numbers<[1], [0], [0], [1], [0, 0, 1, 1], [], []>} : vector<256x128xf32>, vector<128x1xf32>, vector<256x1xf32> -> vector<256x1xf32>
    %cst_6 = arith.constant 7.812500e-03 : f32
    %8 = vector.broadcast %cst_6 : f32 to vector<256x1xf32>
    %9 = arith.mulf %7, %8 : vector<256x1xf32>
    %10 = arith.mulf %5, %5 : vector<256x1xf32>
    %11 = arith.subf %9, %10 : vector<256x1xf32>
    %12 = vector.broadcast %5 : vector<256x1xf32> to vector<256x128xf32>
    %13 = arith.subf %1, %12 : vector<256x128xf32>
    %cst_7 = arith.constant 9.99999974E-6 : f32
    %14 = vector.broadcast %cst_7 : f32 to vector<256x1xf32>
    %15 = arith.addf %11, %14 : vector<256x1xf32>
    %16 = math.rsqrt %15 : vector<256x1xf32>
    %17 = vector.broadcast %16 : vector<256x1xf32> to vector<256x128xf32>
    %18 = arith.mulf %13, %17 : vector<256x128xf32>
    %c0_8 = arith.constant 0 : index
    %c0_9 = arith.constant 0 : index
    %19 = vector.load %arg2[%c0_8, %c0_9] : memref<1x128xf32, #tpu.memory_space<vmem>>, vector<1x128xf32>
    %20 = vector.broadcast %19 : vector<1x128xf32> to vector<256x128xf32>
    %21 = arith.mulf %18, %20 : vector<256x128xf32>
    %c0_10 = arith.constant 0 : index
    %c0_11 = arith.constant 0 : index
    %22 = vector.load %arg3[%c0_10, %c0_11] : memref<1x128xf32, #tpu.memory_space<vmem>>, vector<1x128xf32>
    %23 = vector.broadcast %22 : vector<1x128xf32> to vector<256x128xf32>
    %24 = arith.addf %21, %23 : vector<256x128xf32>
    %25 = vector.shape_cast %24 : vector<256x128xf32> to vector<1x16x16x128xf32>
    %c0_12 = arith.constant 0 : index
    %c0_13 = arith.constant 0 : index
    %26 = vector.load %arg4[%c0_12, %c0_13] : memref<9x128xf32, #tpu.memory_space<vmem>>, vector<9x128xf32>
    %c0_14 = arith.constant 0 : index
    %c0_15 = arith.constant 0 : index
    %27 = vector.load %arg5[%c0_14, %c0_15] : memref<1x128xf32, #tpu.memory_space<vmem>>, vector<1x128xf32>
    %28 = tpu.iota {dimensions = array<i32: 2>} : vector<1x1x16x128xi32>
    %c1_i32 = arith.constant 1 : i32
    %29 = tpu.dynamic_rotate %25 by %c1_i32 dim 2 : vector<1x16x16x128xf32>, i32 -> vector<1x16x16x128xf32>
    %c1_i32_16 = arith.constant 1 : i32
    %30 = vector.broadcast %c1_i32_16 : i32 to vector<1x1x16x128xi32>
    %31 = arith.cmpi sge, %28, %30 : vector<1x1x16x128xi32>
    %c17_i32 = arith.constant 17 : i32
    %32 = vector.broadcast %c17_i32 : i32 to vector<1x1x16x128xi32>
    %33 = arith.cmpi slt, %28, %32 : vector<1x1x16x128xi32>
    %34 = arith.andi %31, %33 : vector<1x1x16x128xi1>
    %35 = arith.extui %34 : vector<1x1x16x128xi1> to vector<1x1x16x128xi32>
    %36 = arith.sitofp %35 : vector<1x1x16x128xi32> to vector<1x1x16x128xf32>
    %c15_i32 = arith.constant 15 : i32
    %37 = tpu.dynamic_rotate %25 by %c15_i32 dim 2 : vector<1x16x16x128xf32>, i32 -> vector<1x16x16x128xf32>
    %c-1_i32 = arith.constant -1 : i32
    %38 = vector.broadcast %c-1_i32 : i32 to vector<1x1x16x128xi32>
    %39 = arith.cmpi sge, %28, %38 : vector<1x1x16x128xi32>
    %c15_i32_17 = arith.constant 15 : i32
    %40 = vector.broadcast %c15_i32_17 : i32 to vector<1x1x16x128xi32>
    %41 = arith.cmpi slt, %28, %40 : vector<1x1x16x128xi32>
    %42 = arith.andi %39, %41 : vector<1x1x16x128xi1>
    %43 = arith.extui %42 : vector<1x1x16x128xi1> to vector<1x1x16x128xi32>
    %44 = arith.sitofp %43 : vector<1x1x16x128xi32> to vector<1x1x16x128xf32>
    %45 = vector.extract_strided_slice %26 {offsets = [3, 0], sizes = [1, 128], strides = [1, 1]} : vector<9x128xf32> to vector<1x128xf32>
    %46 = vector.shape_cast %45 : vector<1x128xf32> to vector<128xf32>
    %47 = vector.shape_cast %46 : vector<128xf32> to vector<1x1x1x128xf32>
    %48 = vector.broadcast %47 : vector<1x1x1x128xf32> to vector<1x1x16x128xf32>
    %49 = arith.mulf %48, %36 : vector<1x1x16x128xf32>
    %50 = vector.broadcast %49 : vector<1x1x16x128xf32> to vector<1x16x16x128xf32>
    %51 = arith.mulf %29, %50 : vector<1x16x16x128xf32>
    %52 = vector.extract_strided_slice %26 {offsets = [4, 0], sizes = [1, 128], strides = [1, 1]} : vector<9x128xf32> to vector<1x128xf32>
    %53 = vector.shape_cast %52 : vector<1x128xf32> to vector<128xf32>
    %54 = vector.shape_cast %53 : vector<128xf32> to vector<1x1x1x128xf32>
    %55 = vector.broadcast %54 : vector<1x1x1x128xf32> to vector<1x16x16x128xf32>
    %56 = arith.mulf %25, %55 : vector<1x16x16x128xf32>
    %57 = arith.addf %51, %56 : vector<1x16x16x128xf32>
    %58 = vector.extract_strided_slice %26 {offsets = [5, 0], sizes = [1, 128], strides = [1, 1]} : vector<9x128xf32> to vector<1x128xf32>
    %59 = vector.shape_cast %58 : vector<1x128xf32> to vector<128xf32>
    %60 = vector.shape_cast %59 : vector<128xf32> to vector<1x1x1x128xf32>
    %61 = vector.broadcast %60 : vector<1x1x1x128xf32> to vector<1x1x16x128xf32>
    %62 = arith.mulf %61, %44 : vector<1x1x16x128xf32>
    %63 = vector.broadcast %62 : vector<1x1x16x128xf32> to vector<1x16x16x128xf32>
    %64 = arith.mulf %37, %63 : vector<1x16x16x128xf32>
    %65 = arith.addf %57, %64 : vector<1x16x16x128xf32>
    %66 = vector.shape_cast %27 : vector<1x128xf32> to vector<1x1x1x128xf32>
    %67 = vector.broadcast %66 : vector<1x1x1x128xf32> to vector<1x16x16x128xf32>
    %68 = arith.addf %65, %67 : vector<1x16x16x128xf32>
    %c0_18 = arith.constant 0 : index
    %c0_19 = arith.constant 0 : index
    %c0_20 = arith.constant 0 : index
    %c0_21 = arith.constant 0 : index
    %69 = vector.load %arg8[%c0_18, %c0_19, %c0_20, %c0_21] : memref<1x16x16x128xf32, #tpu.memory_space<vmem>>, vector<1x16x16x128xf32>
    tpu.vector_store %arg8[%c0_18, %c0_19, %c0_20, %c0_21], %68 {strides = array<i32>} : memref<1x16x16x128xf32, #tpu.memory_space<vmem>>, vector<1x16x16x128xf32>,
    %70 = vector.extract_strided_slice %26 {offsets = [0, 0], sizes = [1, 128], strides = [1, 1]} : vector<9x128xf32> to vector<1x128xf32>
    %71 = vector.shape_cast %70 : vector<1x128xf32> to vector<128xf32>
    %72 = vector.shape_cast %71 : vector<128xf32> to vector<1x1x1x128xf32>
    %73 = vector.broadcast %72 : vector<1x1x1x128xf32> to vector<1x1x16x128xf32>
    %74 = arith.mulf %73, %36 : vector<1x1x16x128xf32>
    %75 = vector.broadcast %74 : vector<1x1x16x128xf32> to vector<1x16x16x128xf32>
    %76 = arith.mulf %29, %75 : vector<1x16x16x128xf32>
    %77 = vector.extract_strided_slice %26 {offsets = [1, 0], sizes = [1, 128], strides = [1, 1]} : vector<9x128xf32> to vector<1x128xf32>
    %78 = vector.shape_cast %77 : vector<1x128xf32> to vector<128xf32>
    %79 = vector.shape_cast %78 : vector<128xf32> to vector<1x1x1x128xf32>
    %80 = vector.broadcast %79 : vector<1x1x1x128xf32> to vector<1x16x16x128xf32>
    %81 = arith.mulf %25, %80 : vector<1x16x16x128xf32>
    %82 = arith.addf %76, %81 : vector<1x16x16x128xf32>
    %83 = vector.extract_strided_slice %26 {offsets = [2, 0], sizes = [1, 128], strides = [1, 1]} : vector<9x128xf32> to vector<1x128xf32>
    %84 = vector.shape_cast %83 : vector<1x128xf32> to vector<128xf32>
    %85 = vector.shape_cast %84 : vector<128xf32> to vector<1x1x1x128xf32>
    %86 = vector.broadcast %85 : vector<1x1x1x128xf32> to vector<1x1x16x128xf32>
    %87 = arith.mulf %86, %44 : vector<1x1x16x128xf32>
    %88 = vector.broadcast %87 : vector<1x1x16x128xf32> to vector<1x16x16x128xf32>
    %89 = arith.mulf %37, %88 : vector<1x16x16x128xf32>
    %90 = arith.addf %82, %89 : vector<1x16x16x128xf32>
    %c0_22 = arith.constant 0 : index
    %c1 = arith.constant 1 : index
    %c0_23 = arith.constant 0 : index
    %c0_24 = arith.constant 0 : index
    %91 = vector.load %arg8[%c0_22, %c1, %c0_23, %c0_24] : memref<1x16x16x128xf32, #tpu.memory_space<vmem>>, vector<1x15x16x128xf32>
    %92 = vector.extract_strided_slice %90 {offsets = [0, 0, 0, 0], sizes = [1, 15, 16, 128], strides = [1, 1, 1, 1]} : vector<1x16x16x128xf32> to vector<1x15x16x128xf32>
    %93 = arith.addf %91, %92 : vector<1x15x16x128xf32>
    %c0_25 = arith.constant 0 : index
    %c1_26 = arith.constant 1 : index
    %c0_27 = arith.constant 0 : index
    %c0_28 = arith.constant 0 : index
    %94 = vector.load %arg8[%c0_25, %c1_26, %c0_27, %c0_28] : memref<1x16x16x128xf32, #tpu.memory_space<vmem>>, vector<1x15x16x128xf32>
    tpu.vector_store %arg8[%c0_25, %c1_26, %c0_27, %c0_28], %93 {strides = array<i32>} : memref<1x16x16x128xf32, #tpu.memory_space<vmem>>, vector<1x15x16x128xf32>,
    %95 = vector.extract_strided_slice %26 {offsets = [6, 0], sizes = [1, 128], strides = [1, 1]} : vector<9x128xf32> to vector<1x128xf32>
    %96 = vector.shape_cast %95 : vector<1x128xf32> to vector<128xf32>
    %97 = vector.shape_cast %96 : vector<128xf32> to vector<1x1x1x128xf32>
    %98 = vector.broadcast %97 : vector<1x1x1x128xf32> to vector<1x1x16x128xf32>
    %99 = arith.mulf %98, %36 : vector<1x1x16x128xf32>
    %100 = vector.broadcast %99 : vector<1x1x16x128xf32> to vector<1x16x16x128xf32>
    %101 = arith.mulf %29, %100 : vector<1x16x16x128xf32>
    %102 = vector.extract_strided_slice %26 {offsets = [7, 0], sizes = [1, 128], strides = [1, 1]} : vector<9x128xf32> to vector<1x128xf32>
    %103 = vector.shape_cast %102 : vector<1x128xf32> to vector<128xf32>
    %104 = vector.shape_cast %103 : vector<128xf32> to vector<1x1x1x128xf32>
    %105 = vector.broadcast %104 : vector<1x1x1x128xf32> to vector<1x16x16x128xf32>
    %106 = arith.mulf %25, %105 : vector<1x16x16x128xf32>
    %107 = arith.addf %101, %106 : vector<1x16x16x128xf32>
    %108 = vector.extract_strided_slice %26 {offsets = [8, 0], sizes = [1, 128], strides = [1, 1]} : vector<9x128xf32> to vector<1x128xf32>
    %109 = vector.shape_cast %108 : vector<1x128xf32> to vector<128xf32>
    %110 = vector.shape_cast %109 : vector<128xf32> to vector<1x1x1x128xf32>
    %111 = vector.broadcast %110 : vector<1x1x1x128xf32> to vector<1x1x16x128xf32>
    %112 = arith.mulf %111, %44 : vector<1x1x16x128xf32>
    %113 = vector.broadcast %112 : vector<1x1x16x128xf32> to vector<1x16x16x128xf32>
    %114 = arith.mulf %37, %113 : vector<1x16x16x128xf32>
    %115 = arith.addf %107, %114 : vector<1x16x16x128xf32>
    %c0_29 = arith.constant 0 : index
    %c0_30 = arith.constant 0 : index
    %c0_31 = arith.constant 0 : index
    %c0_32 = arith.constant 0 : index
    %116 = vector.load %arg8[%c0_29, %c0_30, %c0_31, %c0_32] : memref<1x16x16x128xf32, #tpu.memory_space<vmem>>, vector<1x15x16x128xf32>
    %117 = vector.extract_strided_slice %115 {offsets = [0, 1, 0, 0], sizes = [1, 15, 16, 128], strides = [1, 1, 1, 1]} : vector<1x16x16x128xf32> to vector<1x15x16x128xf32>
    %118 = arith.addf %116, %117 : vector<1x15x16x128xf32>
    %c0_33 = arith.constant 0 : index
    %c0_34 = arith.constant 0 : index
    %c0_35 = arith.constant 0 : index
    %c0_36 = arith.constant 0 : index
    %119 = vector.load %arg8[%c0_33, %c0_34, %c0_35, %c0_36] : memref<1x16x16x128xf32, #tpu.memory_space<vmem>>, vector<1x15x16x128xf32>
    tpu.vector_store %arg8[%c0_33, %c0_34, %c0_35, %c0_36], %118 {strides = array<i32>} : memref<1x16x16x128xf32, #tpu.memory_space<vmem>>, vector<1x15x16x128xf32>,
    %c0_37 = arith.constant 0 : index
    %c0_38 = arith.constant 0 : index
    %c0_39 = arith.constant 0 : index
    %c0_40 = arith.constant 0 : index
    %120 = vector.load %arg8[%c0_37, %c0_38, %c0_39, %c0_40] : memref<1x16x16x128xf32, #tpu.memory_space<vmem>>, vector<1x16x16x128xf32>
    %c0_41 = arith.constant 0 : index
    %c0_42 = arith.constant 0 : index
    %c0_43 = arith.constant 0 : index
    %c0_44 = arith.constant 0 : index
    %121 = vector.load %arg6[%c0_41, %c0_42, %c0_43, %c0_44] : memref<1x16x16x128xf32, #tpu.memory_space<vmem>>, vector<1x16x16x128xf32>
    tpu.vector_store %arg6[%c0_41, %c0_42, %c0_43, %c0_44], %120 {strides = array<i32>} : memref<1x16x16x128xf32, #tpu.memory_space<vmem>>, vector<1x16x16x128xf32>,
    %122 = vector.shape_cast %120 : vector<1x16x16x128xf32> to vector<256x128xf32>
    %cst_45 = arith.constant 1.000000e+00 : f32
    %123 = vector.broadcast %cst_45 : f32 to vector<1x256xf32>
    %cst_46 = arith.constant dense<0.000000e+00> : vector<1x128xf32>
    %124 = tpu.matmul %123, %122, %cst_46 {dimension_numbers = #tpu.dot_dimension_numbers<[1], [0], [0], [1], [0, 0, 1, 1], [], []>} : vector<1x256xf32>, vector<256x128xf32>, vector<1x128xf32> -> vector<1x128xf32>
    %125 = arith.mulf %122, %122 : vector<256x128xf32>
    %cst_47 = arith.constant dense<0.000000e+00> : vector<1x128xf32>
    %126 = tpu.matmul %123, %125, %cst_47 {dimension_numbers = #tpu.dot_dimension_numbers<[1], [0], [0], [1], [0, 0, 1, 1], [], []>} : vector<1x256xf32>, vector<256x128xf32>, vector<1x128xf32> -> vector<1x128xf32>
    %127 = tpu.concatenate %124, %126 in 0 : vector<1x128xf32>, vector<1x128xf32> -> vector<2x128xf32>
    %128 = vector.shape_cast %127 : vector<2x128xf32> to vector<1x2x128xf32>
    %c0_48 = arith.constant 0 : index
    %c0_49 = arith.constant 0 : index
    %c0_50 = arith.constant 0 : index
    %129 = vector.load %arg7[%c0_48, %c0_49, %c0_50] : memref<1x2x128xf32, #tpu.memory_space<vmem>>, vector<1x2x128xf32>
    tpu.vector_store %arg7[%c0_48, %c0_49, %c0_50], %128 {strides = array<i32>} : memref<1x2x128xf32, #tpu.memory_space<vmem>>, vector<1x2x128xf32>,
    return
  }
  func.func @transform_0(%arg0: i32) -> (i32, i32, i32, i32) {
    %c0_i32 = arith.constant 0 : i32
    %c0_i32_0 = arith.constant 0 : i32
    %c0_i32_1 = arith.constant 0 : i32
    %c0_i32_2 = arith.constant 0 : i32
    return %arg0, %c0_i32, %c0_i32_0, %c0_i32_1 : i32, i32, i32, i32
  }
  func.func @transform_1(%arg0: i32) -> (i32, i32) {
    %c0_i32 = arith.constant 0 : i32
    %c0_i32_0 = arith.constant 0 : i32
    %c0_i32_1 = arith.constant 0 : i32
    return %c0_i32, %c0_i32_0 : i32, i32
  }
  func.func @transform_2(%arg0: i32) -> (i32, i32) {
    %c0_i32 = arith.constant 0 : i32
    %c0_i32_0 = arith.constant 0 : i32
    %c0_i32_1 = arith.constant 0 : i32
    return %c0_i32, %c0_i32_0 : i32, i32
  }
  func.func @transform_3(%arg0: i32) -> (i32, i32) {
    %c0_i32 = arith.constant 0 : i32
    %c0_i32_0 = arith.constant 0 : i32
    %c0_i32_1 = arith.constant 0 : i32
    return %c0_i32, %c0_i32_0 : i32, i32
  }
  func.func @transform_4(%arg0: i32) -> (i32, i32) {
    %c0_i32 = arith.constant 0 : i32
    %c0_i32_0 = arith.constant 0 : i32
    %c0_i32_1 = arith.constant 0 : i32
    return %c0_i32, %c0_i32_0 : i32, i32
  }
  func.func @transform_5(%arg0: i32) -> (i32, i32, i32, i32) {
    %c0_i32 = arith.constant 0 : i32
    %c0_i32_0 = arith.constant 0 : i32
    %c0_i32_1 = arith.constant 0 : i32
    %c0_i32_2 = arith.constant 0 : i32
    return %arg0, %c0_i32, %c0_i32_0, %c0_i32_1 : i32, i32, i32, i32
  }
  func.func @transform_6(%arg0: i32) -> (i32, i32, i32) {
    %c0_i32 = arith.constant 0 : i32
    %c0_i32_0 = arith.constant 0 : i32
    %c0_i32_1 = arith.constant 0 : i32
    return %arg0, %c0_i32, %c0_i32_0 : i32, i32, i32
  }
}

</mosaic_0001>

<llo_original>
// kernel: tpu_custom_call.1
$region0: #{tpu_custom_call.1}
  #allocation0 [shape = 'u32[]', space=smem, size = 0x4, offset = 0x4, fixed_abs, tag = 'smem constant byte address 0x4 - core index']
  #allocation1 [shape = 'u32[144,128]{1,0:T(1,128)}', space=vmem, size = 0x12000, scoped, tag = 'internal scratch']
  #allocation2 [shape = 'f32[1,16,16,128]{3,2,1,0:T(8,128)}', space=vmem, size = 0x20000, scoped, tag = 'scratch operand']
  %s0 = inlined_call_operand.hbm [shape: f32[2,16,16,128], index: 0, kind: input, shape index: {}]
  %s1 = inlined_call_operand.vmem [shape: f32[1,128], index: 1, kind: input, shape index: {}]
  %s2 = inlined_call_operand.vmem [shape: f32[1,128], index: 2, kind: input, shape index: {}]
  %s3 = inlined_call_operand.hbm [shape: f32[9,128], index: 3, kind: input, shape index: {}]
  %s4 = inlined_call_operand.vmem [shape: f32[1,128], index: 4, kind: input, shape index: {}]
  %s5 = inlined_call_operand.hbm [shape: f32[2,16,16,128], index: 5, kind: output, shape index: {0}]
  %s6 = inlined_call_operand.hbm [shape: f32[2,2,128], index: 6, kind: output, shape index: {1}]
  %7 = xla_tuple %s5, %s6
  %s8 = sld [smem:[#allocation0]]
  $region69: #{tpu_custom_call.1} parent=0
    _
  %s10 = ssub.s32 1, %s8
  %s11 = scalar_select 0, %s10, %s8
  $region1: #{tpu_custom_call.1} parent=0
    #allocation3 [shape = 'u8[262144]{0}', space=vmem, size = 0x40000, scoped, tag = 'input window, operand 0']
    #allocation4 [shape = 's32[2]{0}', space=sflag, size = 0x8, scoped, tag = 'scoped memory for tpu_custom_call.1']
    #allocation5 [shape = 's32[2]{0}', space=sflag, size = 0x8, scoped, tag = 'scoped memory for tpu_custom_call.1']
    #allocation6 [shape = 'u8[8192]{0}', space=vmem, size = 0x2000, scoped, tag = 'input window, operand 3, single buffered']
    #allocation7 [shape = 's32[1]{0}', space=sflag, size = 0x4, scoped, tag = 'scoped memory for tpu_custom_call.1']
    #allocation8 [shape = 'u8[262144]{0}', space=vmem, size = 0x40000, scoped, tag = 'output window, operand 0']
    #allocation9 [shape = 'u8[2048]{0}', space=vmem, size = 0x800, scoped, tag = 'output window, operand 1']
    #allocation10 [shape = 's32[2]{0}', space=sflag, size = 0x8, scoped, tag = 'scoped memory for tpu_custom_call.1']
    %12 = vsyncpa [#allocation4], 0
    %s13 = scalar_lea.sflag [#allocation4], 1
    %14 = vsyncpa %s13, 0
    %15 = vsyncpa [#allocation7], 0
    %16 = vsyncpa [#allocation5], 0
    %s17 = scalar_lea.sflag [#allocation5], 1
    %18 = vsyncpa %s17, 0
    %19 = vsyncpa [#allocation10], 0
    %s20 = scalar_lea.sflag [#allocation10], 1
    %21 = vsyncpa %s20, 0
    loop: start=0, step=1, limit=4
    $region2: #{tpu_custom_call.1} parent=1 // loop_pre_header
      _
    $region3: #{tpu_custom_call.1} parent=1 // loop_header
      %s23 = sphi 0, %s27
      %p24 = scmp.ge.s32.totalorder %s23, 4
      %s33 = sphi 0, %s35
      %s36 = sphi 0, %s33
      %s37 = sphi 0, %s36
      %s53 = sphi 0, %s37
      %s57 = sphi 0, %s57
      %s59 = sphi 0, %s57
      %s60 = sphi 0, %s59
      %s74 = sphi 0, %s60
      %s78 = sphi 0, %s78
      %s80 = sphi 0, %s78
      %s81 = sphi 0, %s80
      %s95 = sphi 0, %s81
      %s99 = sphi 0, %s99
      %s101 = sphi 0, %s99
      %s102 = sphi 0, %s101
      %s116 = sphi 0, %s102
      %s120 = sphi 0, %s120
      %s122 = sphi 0, %s120
      %s123 = sphi 0, %s122
      %s137 = sphi 0, %s123
      %s143 = sphi 0, %s145
      %s146 = sphi 0, %s143
      %s147 = sphi 0, %s146
      %s163 = sphi 0, %s147
      %s169 = sphi 0, %s171
      %s172 = sphi 0, %s169
      %s173 = sphi 0, %s172
      %s189 = sphi 0, %s173
    $region4: #{tpu_custom_call.1} parent=1 // loop_header_branch
      %26 = sbr.rel (%p24) target = $region8
    $region5: #{tpu_custom_call.1} parent=1 // loop_body
      %s28 = ssub.s32 %s23, 1
      %s29 = ssub.s32 %s23, 2
      %s30 = sadd.s32 %s23, 1
      %s31 = ssub.s32 %s23, %s30
      %p32 = scmp.eq.s32.totalorder %s31, 0
      %s34 = sadd.s32 %s33, 1
      %s35 = scalar_select %p32, %s33, %s34
      %p38 = pneg %p32
      %p39 = scmp.eq.s32.totalorder %s23, 1
      %p40 = por %p38, %p39
      %p41 = scmp.ne.s32.totalorder %s33, %s36
      %p42 = scmp.eq.s32.totalorder %s23, 0
      %p43 = por %p41, %p42
      %p44 = scmp.ne.s32.totalorder %s33, %s36
      %p45 = scmp.eq.s32.totalorder %s28, 1
      %p46 = por %p44, %p45
      %p47 = scmp.ne.s32.totalorder %s36, %s37
      %p48 = scmp.eq.s32.totalorder %s28, 0
      %p49 = por %p47, %p48
      %p50 = scmp.ne.s32.totalorder %s36, %s37
      %p51 = scmp.eq.s32.totalorder %s29, 1
      %p52 = por %p50, %p51
      %p54 = scmp.ne.s32.totalorder %s37, %s53
      %p55 = scmp.eq.s32.totalorder %s29, 0
      %p56 = por %p54, %p55
      %s58 = sadd.s32 %s57, 1
      %p61 = scmp.eq.s32.totalorder %s23, 1
      %p62 = scmp.ne.s32.totalorder %s57, %s59
      %p63 = scmp.eq.s32.totalorder %s23, 0
      %p64 = por %p62, %p63
      %p65 = scmp.ne.s32.totalorder %s57, %s59
      %p66 = scmp.eq.s32.totalorder %s28, 1
      %p67 = por %p65, %p66
      %p68 = scmp.ne.s32.totalorder %s59, %s60
      %p69 = scmp.eq.s32.totalorder %s28, 0
      %p70 = por %p68, %p69
      %p71 = scmp.ne.s32.totalorder %s59, %s60
      %p72 = scmp.eq.s32.totalorder %s29, 1
      %p73 = por %p71, %p72
      %p75 = scmp.ne.s32.totalorder %s60, %s74
      %p76 = scmp.eq.s32.totalorder %s29, 0
      %p77 = por %p75, %p76
      %s79 = sadd.s32 %s78, 1
      %p82 = scmp.eq.s32.totalorder %s23, 1
      %p83 = scmp.ne.s32.totalorder %s78, %s80
      %p84 = scmp.eq.s32.totalorder %s23, 0
      %p85 = por %p83, %p84
      %p86 = scmp.ne.s32.totalorder %s78, %s80
      %p87 = scmp.eq.s32.totalorder %s28, 1
      %p88 = por %p86, %p87
      %p89 = scmp.ne.s32.totalorder %s80, %s81
      %p90 = scmp.eq.s32.totalorder %s28, 0
      %p91 = por %p89, %p90
      %p92 = scmp.ne.s32.totalorder %s80, %s81
      %p93 = scmp.eq.s32.totalorder %s29, 1
      %p94 = por %p92, %p93
      %p96 = scmp.ne.s32.totalorder %s81, %s95
      %p97 = scmp.eq.s32.totalorder %s29, 0
      %p98 = por %p96, %p97
      %s100 = sadd.s32 %s99, 1
      %p103 = scmp.eq.s32.totalorder %s23, 1
      %p104 = scmp.ne.s32.totalorder %s99, %s101
      %p105 = scmp.eq.s32.totalorder %s23, 0
      %p106 = por %p104, %p105
      %p107 = scmp.ne.s32.totalorder %s99, %s101
      %p108 = scmp.eq.s32.totalorder %s28, 1
      %p109 = por %p107, %p108
      %p110 = scmp.ne.s32.totalorder %s101, %s102
      %p111 = scmp.eq.s32.totalorder %s28, 0
      %p112 = por %p110, %p111
      %p113 = scmp.ne.s32.totalorder %s101, %s102
      %p114 = scmp.eq.s32.totalorder %s29, 1
      %p115 = por %p113, %p114
      %p117 = scmp.ne.s32.totalorder %s102, %s116
      %p118 = scmp.eq.s32.totalorder %s29, 0
      %p119 = por %p117, %p118
      %s121 = sadd.s32 %s120, 1
      %p124 = scmp.eq.s32.totalorder %s23, 1
      %p125 = scmp.ne.s32.totalorder %s120, %s122
      %p126 = scmp.eq.s32.totalorder %s23, 0
      %p127 = por %p125, %p126
      %p128 = scmp.ne.s32.totalorder %s120, %s122
      %p129 = scmp.eq.s32.totalorder %s28, 1
      %p130 = por %p128, %p129
      %p131 = scmp.ne.s32.totalorder %s122, %s123
      %p132 = scmp.eq.s32.totalorder %s28, 0
      %p133 = por %p131, %p132
      %p134 = scmp.ne.s32.totalorder %s122, %s123
      %p135 = scmp.eq.s32.totalorder %s29, 1
      %p136 = por %p134, %p135
      %p138 = scmp.ne.s32.totalorder %s123, %s137
      %p139 = scmp.eq.s32.totalorder %s29, 0
      %p140 = por %p138, %p139
      %s141 = ssub.s32 %s23, %s30
      %p142 = scmp.eq.s32.totalorder %s141, 0
      %s144 = sadd.s32 %s143, 1
      %s145 = scalar_select %p142, %s143, %s144
      %p148 = pneg %p142
      %p149 = scmp.eq.s32.totalorder %s23, 1
      %p150 = por %p148, %p149
      %p151 = scmp.ne.s32.totalorder %s143, %s146
      %p152 = scmp.eq.s32.totalorder %s23, 0
      %p153 = por %p151, %p152
      %p154 = scmp.ne.s32.totalorder %s143, %s146
      %p155 = scmp.eq.s32.totalorder %s28, 1
      %p156 = por %p154, %p155
      %p157 = scmp.ne.s32.totalorder %s146, %s147
      %p158 = scmp.eq.s32.totalorder %s28, 0
      %p159 = por %p157, %p158
      %p160 = scmp.ne.s32.totalorder %s146, %s147
      %p161 = scmp.eq.s32.totalorder %s29, 1
      %p162 = por %p160, %p161
      %p164 = scmp.ne.s32.totalorder %s147, %s163
      %p165 = scmp.eq.s32.totalorder %s29, 0
      %p166 = por %p164, %p165
      %s167 = ssub.s32 %s23, %s30
      %p168 = scmp.eq.s32.totalorder %s167, 0
      %s170 = sadd.s32 %s169, 1
      %s171 = scalar_select %p168, %s169, %s170
      %p174 = pneg %p168
      %p175 = scmp.eq.s32.totalorder %s23, 1
      %p176 = por %p174, %p175
      %p177 = scmp.ne.s32.totalorder %s169, %s172
      %p178 = scmp.eq.s32.totalorder %s23, 0
      %p179 = por %p177, %p178
      %p180 = scmp.ne.s32.totalorder %s169, %s172
      %p181 = scmp.eq.s32.totalorder %s28, 1
      %p182 = por %p180, %p181
      %p183 = scmp.ne.s32.totalorder %s172, %s173
      %p184 = scmp.eq.s32.totalorder %s28, 0
      %p185 = por %p183, %p184
      %p186 = scmp.ne.s32.totalorder %s172, %s173
      %p187 = scmp.eq.s32.totalorder %s29, 1
      %p188 = por %p186, %p187
      %p190 = scmp.ne.s32.totalorder %s173, %s189
      %p191 = scmp.eq.s32.totalorder %s29, 0
      %p192 = por %p190, %p191
      %p193 = scmp.le.s32.totalorder 1, %s23
      %p194 = scmp.lt.s32.totalorder %s23, 3
      %p195 = pnand %p193, %p194
      %p196 = pneg %p195
      // Predicated region
      $region9: #{tpu_custom_call.1} parent=5 // pred_check
        _
      $region10: #{tpu_custom_call.1} parent=5 // pred_check_branch
        %198 = sbr.rel (%p195) target = $region12
      $region11: #{tpu_custom_call.1} parent=5 // pred_region
        %s199 = ssub.s32 %s23, 1
        // Predicated region
        $region13: #{tpu_custom_call.1} parent=11 // pred_check
          %p200 = pneg %p70
        $region14: #{tpu_custom_call.1} parent=11 // pred_check_branch
          %202 = sbr.rel (%p200) target = $region16
        $region15: #{tpu_custom_call.1} parent=11 // pred_region
          _
        $region16: #{tpu_custom_call.1} parent=11 // pred_fallthru
          _
        // Predicated region
        $region17: #{tpu_custom_call.1} parent=11 // pred_check
          %p203 = pneg %p91
        $region18: #{tpu_custom_call.1} parent=11 // pred_check_branch
          %205 = sbr.rel (%p203) target = $region20
        $region19: #{tpu_custom_call.1} parent=11 // pred_region
          _
        $region20: #{tpu_custom_call.1} parent=11 // pred_fallthru
          _
        // Predicated region
        $region21: #{tpu_custom_call.1} parent=11 // pred_check
          %p206 = pneg %p112
        $region22: #{tpu_custom_call.1} parent=11 // pred_check_branch
          %208 = sbr.rel (%p206) target = $region24
        $region23: #{tpu_custom_call.1} parent=11 // pred_region
          %s210 = ssub.s32 256, 256
          %211 = vsyncadd [#allocation7], %s210
          %s212 = sshll.u32 [#allocation6], 4
          %s213 = int_to_ptr.vmem [resolvable:$true] %s212
          %218 = dma.hbm_to_vmem [thread:$0]  %s3, 256, %s213, [#allocation7], 128, 128, 8
        $region24: #{tpu_custom_call.1} parent=11 // pred_fallthru
          _
        // Predicated region
        $region25: #{tpu_custom_call.1} parent=11 // pred_check
          %p219 = pneg %p133
        $region26: #{tpu_custom_call.1} parent=11 // pred_check_branch
          %221 = sbr.rel (%p219) target = $region28
        $region27: #{tpu_custom_call.1} parent=11 // pred_region
          _
        $region28: #{tpu_custom_call.1} parent=11 // pred_fallthru
          _
      $region12: #{tpu_custom_call.1} parent=5 // pred_fallthru
        _
      %p222 = scmp.lt.s32.totalorder %s23, 2
      // Predicated region
      $region29: #{tpu_custom_call.1} parent=5 // pred_check
        %p223 = pneg %p222
      $region30: #{tpu_custom_call.1} parent=5 // pred_check_branch
        %225 = sbr.rel (%p223) target = $region32
      $region31: #{tpu_custom_call.1} parent=5 // pred_region
        // Predicated region
        $region33: #{tpu_custom_call.1} parent=31 // pred_check
          %p226 = pneg %p43
        $region34: #{tpu_custom_call.1} parent=31 // pred_check_branch
          %228 = sbr.rel (%p226) target = $region36
        $region35: #{tpu_custom_call.1} parent=31 // pred_region
          %s229 = sand.u32 %s33, 1
          %s230 = scalar_lea.sflag [#allocation4], %s229
          %s231 = sand.u32 %s33, 1
          %s232 = smul.addr %s231, 256
          %s233 = scalar_lea.vmem [#allocation3], %s232
          %s235 = ssub.s32 4096, 4096
          %236 = vsyncadd %s230, %s235
          %s237 = smul.addr %s23, 32
          %s238 = smul.addr %s237, 128
          %s239 = scalar_lea.hbm %s0, %s238
          %s240 = sshll.u32 %s233, 4
          %s241 = int_to_ptr.vmem [resolvable:$true] %s240
          %246 = dma.hbm_to_vmem [thread:$0]  %s239, 4096, %s241, %s230, 128, 128, 8
        $region36: #{tpu_custom_call.1} parent=31 // pred_fallthru
          _
      $region32: #{tpu_custom_call.1} parent=5 // pred_fallthru
        _
      %p247 = scmp.le.s32.totalorder 1, %s23
      %p248 = scmp.lt.s32.totalorder %s23, 3
      %p249 = pnand %p247, %p248
      %p250 = pneg %p249
      // Predicated region
      $region37: #{tpu_custom_call.1} parent=5 // pred_check
        _
      $region38: #{tpu_custom_call.1} parent=5 // pred_check_branch
        %252 = sbr.rel (%p249) target = $region40
      $region39: #{tpu_custom_call.1} parent=5 // pred_region
        %s253 = ssub.s32 %s23, 1
        %s254 = sand.u32 %s36, 1
        %s255 = scalar_lea.sflag [#allocation4], %s254
        %s256 = sand.u32 %s36, 1
        %s257 = smul.addr %s256, 256
        %s258 = scalar_lea.vmem [#allocation3], %s257
        // Predicated region
        $region41: #{tpu_custom_call.1} parent=39 // pred_check
          %p259 = pneg %p49
        $region42: #{tpu_custom_call.1} parent=39 // pred_check_branch
          %261 = sbr.rel (%p259) target = $region44
        $region43: #{tpu_custom_call.1} parent=39 // pred_region
          %262 = dma.done %s255, 4096
        $region44: #{tpu_custom_call.1} parent=39 // pred_fallthru
          _
        // Predicated region
        $region45: #{tpu_custom_call.1} parent=39 // pred_check
          %p263 = pneg %p112
        $region46: #{tpu_custom_call.1} parent=39 // pred_check_branch
          %265 = sbr.rel (%p263) target = $region48
        $region47: #{tpu_custom_call.1} parent=39 // pred_region
          %266 = dma.done [#allocation7], 256
        $region48: #{tpu_custom_call.1} parent=39 // pred_fallthru
          _
        %s267 = sand.u32 %s36, 1
        %s268 = scalar_lea.sflag [#allocation4], %s267
        %s269 = sand.u32 %s36, 1
        %s270 = smul.addr %s269, 256
        %s271 = scalar_lea.vmem [#allocation3], %s270
        %p272 = pneg %p49
        %p273 = pneg %p46
        %p274 = pneg %p70
        %p275 = pneg %p67
        %p276 = pneg %p91
        %p277 = pneg %p88
        %p278 = pneg %p112
        %p279 = pneg %p109
        %p280 = pneg %p133
        %p281 = pneg %p130
        %p282 = pneg %p159
        %p283 = pneg %p156
        %s284 = sand.u32 %s146, 1
        %s285 = scalar_lea.sflag [#allocation5], %s284
        %s286 = sand.u32 %s146, 1
        %s287 = smul.addr %s286, 256
        %s288 = scalar_lea.vmem [#allocation8], %s287
        %p289 = pneg %p185
        %p290 = pneg %p182
        %s291 = sand.u32 %s172, 1
        %s292 = scalar_lea.sflag [#allocation10], %s291
        %s293 = sand.u32 %s172, 1
        %s294 = smul.addr %s293, 2
        %s295 = scalar_lea.vmem [#allocation9], %s294
        %v296 = vld [vmem:[%s258] sm:$0xff]
        %v297 = vld [vmem:[%s258 + $0x8] sm:$0xff]
        %v298 = vld [vmem:[%s258 + $0x10] sm:$0xff]
        %v299 = vld [vmem:[%s258 + $0x18] sm:$0xff]
        %v300 = vld [vmem:[%s258 + $0x20] sm:$0xff]
        %v301 = vld [vmem:[%s258 + $0x28] sm:$0xff]
        %v302 = vld [vmem:[%s258 + $0x30] sm:$0xff]
        %v303 = vld [vmem:[%s258 + $0x38] sm:$0xff]
        %v304 = vld [vmem:[%s258 + $0x40] sm:$0xff]
        %v305 = vld [vmem:[%s258 + $0x48] sm:$0xff]
        %v306 = vld [vmem:[%s258 + $0x50] sm:$0xff]
        %v307 = vld [vmem:[%s258 + $0x58] sm:$0xff]
        %v308 = vld [vmem:[%s258 + $0x60] sm:$0xff]
        %v309 = vld [vmem:[%s258 + $0x68] sm:$0xff]
        %v310 = vld [vmem:[%s258 + $0x70] sm:$0xff]
        %v311 = vld [vmem:[%s258 + $0x78] sm:$0xff]
        %v312 = vld [vmem:[%s258 + $0x80] sm:$0xff]
        %v313 = vld [vmem:[%s258 + $0x88] sm:$0xff]
        %v314 = vld [vmem:[%s258 + $0x90] sm:$0xff]
        %v315 = vld [vmem:[%s258 + $0x98] sm:$0xff]
        %v316 = vld [vmem:[%s258 + $0xa0] sm:$0xff]
        %v317 = vld [vmem:[%s258 + $0xa8] sm:$0xff]
        %v318 = vld [vmem:[%s258 + $0xb0] sm:$0xff]
        %v319 = vld [vmem:[%s258 + $0xb8] sm:$0xff]
        %v320 = vld [vmem:[%s258 + $0xc0] sm:$0xff]
        %v321 = vld [vmem:[%s258 + $0xc8] sm:$0xff]
        %v322 = vld [vmem:[%s258 + $0xd0] sm:$0xff]
        %v323 = vld [vmem:[%s258 + $0xd8] sm:$0xff]
        %v324 = vld [vmem:[%s258 + $0xe0] sm:$0xff]
        %v325 = vld [vmem:[%s258 + $0xe8] sm:$0xff]
        %v326 = vld [vmem:[%s258 + $0xf0] sm:$0xff]
        %v327 = vld [vmem:[%s258 + $0xf8] sm:$0xff]
        %328 = vmatprep.subr.mxu0 0.0
        %329 = vmatpush1.msra.mxu0 1.0
        %330 = vmatprep.subr.mxu0 0.0
        %331 = vmatpush1.msra.mxu0 1.0
        %332 = vmatprep.subr.mxu0 0.0
        %333 = vmatpush1.msra.mxu0 1.0
        %334 = vmatprep.subr.mxu0 0.0
        %335 = vmatpush1.msra.mxu0 1.0
        %336 = vmatprep.subr.mxu0 0.0
        %337 = vmatpush1.msra.mxu0 1.0
        %338 = vmatprep.subr.mxu0 0.0
        %339 = vmatpush1.msra.mxu0 1.0
        %340 = vmatprep.subr.mxu0 0.0
        %341 = vmatpush1.msra.mxu0 1.0
        %342 = vmatprep.subr.mxu0 0.0
        %343 = vmatpush1.msra.mxu0 1.0
        %344 = vmatprep.subr.mxu0 0.0
        %345 = vmatpush1.msra.mxu0 1.0
        %346 = vmatprep.subr.mxu0 0.0
        %347 = vmatpush1.msra.mxu0 1.0
        %348 = vmatprep.subr.mxu0 0.0
        %349 = vmatpush1.msra.mxu0 1.0
        %350 = vmatprep.subr.mxu0 0.0
        %351 = vmatpush1.msra.mxu0 1.0
        %352 = vmatprep.subr.mxu0 0.0
        %353 = vmatpush1.msra.mxu0 1.0
        %354 = vmatprep.subr.mxu0 0.0
        %355 = vmatpush1.msra.mxu0 1.0
        %356 = vmatprep.subr.mxu0 0.0
        %357 = vmatpush1.msra.mxu0 1.0
        %358 = vmatprep.subr.mxu0 0.0
        %359 = vmatpush1.msra.mxu0 1.0
        %360 = vmatprep.subr.mxu0 0.0
        %361 = vmatpush2.msra.mxu0 0.0
        %362 = vmatprep.subr.mxu0 0.0
        %363 = vmatpush2.msra.mxu0 0.0
        %364 = vmatprep.subr.mxu0 0.0
        %365 = vmatpush2.msra.mxu0 0.0
        %366 = vmatprep.subr.mxu0 0.0
        %367 = vmatpush2.msra.mxu0 0.0
        %368 = vmatprep.subr.mxu0 0.0
        %369 = vmatpush2.msra.mxu0 0.0
        %370 = vmatprep.subr.mxu0 0.0
        %371 = vmatpush2.msra.mxu0 0.0
        %372 = vmatprep.subr.mxu0 0.0
        %373 = vmatpush2.msra.mxu0 0.0
        %374 = vmatprep.subr.mxu0 0.0
        %375 = vmatpush2.msra.mxu0 0.0
        %376 = vmatprep.subr.mxu0 0.0
        %377 = vmatpush2.msra.mxu0 0.0
        %378 = vmatprep.subr.mxu0 0.0
        %379 = vmatpush2.msra.mxu0 0.0
        %380 = vmatprep.subr.mxu0 0.0
        %381 = vmatpush2.msra.mxu0 0.0
        %382 = vmatprep.subr.mxu0 0.0
        %383 = vmatpush2.msra.mxu0 0.0
        %384 = vmatprep.subr.mxu0 0.0
        %385 = vmatpush2.msra.mxu0 0.0
        %386 = vmatprep.subr.mxu0 0.0
        %387 = vmatpush2.msra.mxu0 0.0
        %388 = vmatprep.subr.mxu0 0.0
        %389 = vmatpush2.msra.mxu0 0.0
        %390 = vmatprep.subr.mxu0 0.0
        %391 = vmatpush2.msra.mxu0 0.0
        %392 = vmatprep.mubr.f32.mxu0 0.0
        %393 = vmatmul.mubr.f32.gmra.mxu0 %v296
        %v394 = vpop.f32.mrf.mxu0
        %v395 = vadd.f32 0.0, %v394
        %v396 = vpop.f32.mrf.mxu0
        %397 = vmatprep.mubr.f32.mxu0 0.0
        %398 = vmatmul.mubr.f32.gmra.mxu0 %v297
        %v399 = vpop.f32.mrf.mxu0
        %v400 = vadd.f32 0.0, %v399
        %v401 = vpop.f32.mrf.mxu0
        %402 = vmatprep.mubr.f32.mxu0 0.0
        %403 = vmatmul.mubr.f32.gmra.mxu0 %v298
        %v404 = vpop.f32.mrf.mxu0
        %v405 = vadd.f32 0.0, %v404
        %v406 = vpop.f32.mrf.mxu0
        %407 = vmatprep.mubr.f32.mxu0 0.0
        %408 = vmatmul.mubr.f32.gmra.mxu0 %v299
        %v409 = vpop.f32.mrf.mxu0
        %v410 = vadd.f32 0.0, %v409
        %v411 = vpop.f32.mrf.mxu0
        %412 = vmatprep.mubr.f32.mxu0 0.0
        %413 = vmatmul.mubr.f32.gmra.mxu0 %v300
        %v414 = vpop.f32.mrf.mxu0
        %v415 = vadd.f32 0.0, %v414
        %v416 = vpop.f32.mrf.mxu0
        %417 = vmatprep.mubr.f32.mxu0 0.0
        %418 = vmatmul.mubr.f32.gmra.mxu0 %v301
        %v419 = vpop.f32.mrf.mxu0
        %v420 = vadd.f32 0.0, %v419
        %v421 = vpop.f32.mrf.mxu0
        %422 = vmatprep.mubr.f32.mxu0 0.0
        %423 = vmatmul.mubr.f32.gmra.mxu0 %v302
        %v424 = vpop.f32.mrf.mxu0
        %v425 = vadd.f32 0.0, %v424
        %v426 = vpop.f32.mrf.mxu0
        %427 = vmatprep.mubr.f32.mxu0 0.0
        %428 = vmatmul.mubr.f32.gmra.mxu0 %v303
        %v429 = vpop.f32.mrf.mxu0
        %v430 = vadd.f32 0.0, %v429
        %v431 = vpop.f32.mrf.mxu0
        %432 = vmatprep.mubr.f32.mxu0 0.0
        %433 = vmatmul.mubr.f32.gmra.mxu0 %v304
        %v434 = vpop.f32.mrf.mxu0
        %v435 = vadd.f32 0.0, %v434
        %v436 = vpop.f32.mrf.mxu0
        %437 = vmatprep.mubr.f32.mxu0 0.0
        %438 = vmatmul.mubr.f32.gmra.mxu0 %v305
        %v439 = vpop.f32.mrf.mxu0
        %v440 = vadd.f32 0.0, %v439
        %v441 = vpop.f32.mrf.mxu0
        %442 = vmatprep.mubr.f32.mxu0 0.0
        %443 = vmatmul.mubr.f32.gmra.mxu0 %v306
        %v444 = vpop.f32.mrf.mxu0
        %v445 = vadd.f32 0.0, %v444
        %v446 = vpop.f32.mrf.mxu0
        %447 = vmatprep.mubr.f32.mxu0 0.0
        %448 = vmatmul.mubr.f32.gmra.mxu0 %v307
        %v449 = vpop.f32.mrf.mxu0
        %v450 = vadd.f32 0.0, %v449
        %v451 = vpop.f32.mrf.mxu0
        %452 = vmatprep.mubr.f32.mxu0 0.0
        %453 = vmatmul.mubr.f32.gmra.mxu0 %v308
        %v454 = vpop.f32.mrf.mxu0
        %v455 = vadd.f32 0.0, %v454
        %v456 = vpop.f32.mrf.mxu0
        %457 = vmatprep.mubr.f32.mxu0 0.0
        %458 = vmatmul.mubr.f32.gmra.mxu0 %v309
        %v459 = vpop.f32.mrf.mxu0
        %v460 = vadd.f32 0.0, %v459
        %v461 = vpop.f32.mrf.mxu0
        %462 = vmatprep.mubr.f32.mxu0 0.0
        %463 = vmatmul.mubr.f32.gmra.mxu0 %v310
        %v464 = vpop.f32.mrf.mxu0
        %v465 = vadd.f32 0.0, %v464
        %v466 = vpop.f32.mrf.mxu0
        %467 = vmatprep.mubr.f32.mxu0 0.0
        %468 = vmatmul.mubr.f32.gmra.mxu0 %v311
        %v469 = vpop.f32.mrf.mxu0
        %v470 = vadd.f32 0.0, %v469
        %v471 = vpop.f32.mrf.mxu0
        %472 = vmatprep.mubr.f32.mxu0 0.0
        %473 = vmatmul.mubr.f32.gmra.mxu0 %v312
        %v474 = vpop.f32.mrf.mxu0
        %v475 = vadd.f32 0.0, %v474
        %v476 = vpop.f32.mrf.mxu0
        %477 = vmatprep.mubr.f32.mxu0 0.0
        %478 = vmatmul.mubr.f32.gmra.mxu0 %v313
        %v479 = vpop.f32.mrf.mxu0
        %v480 = vadd.f32 0.0, %v479
        %v481 = vpop.f32.mrf.mxu0
        %482 = vmatprep.mubr.f32.mxu0 0.0
        %483 = vmatmul.mubr.f32.gmra.mxu0 %v314
        %v484 = vpop.f32.mrf.mxu0
        %v485 = vadd.f32 0.0, %v484
        %v486 = vpop.f32.mrf.mxu0
        %487 = vmatprep.mubr.f32.mxu0 0.0
        %488 = vmatmul.mubr.f32.gmra.mxu0 %v315
        %v489 = vpop.f32.mrf.mxu0
        %v490 = vadd.f32 0.0, %v489
        %v491 = vpop.f32.mrf.mxu0
        %492 = vmatprep.mubr.f32.mxu0 0.0
        %493 = vmatmul.mubr.f32.gmra.mxu0 %v316
        %v494 = vpop.f32.mrf.mxu0
        %v495 = vadd.f32 0.0, %v494
        %v496 = vpop.f32.mrf.mxu0
        %497 = vmatprep.mubr.f32.mxu0 0.0
        %498 = vmatmul.mubr.f32.gmra.mxu0 %v317
        %v499 = vpop.f32.mrf.mxu0
        %v500 = vadd.f32 0.0, %v499
        %v501 = vpop.f32.mrf.mxu0
        %502 = vmatprep.mubr.f32.mxu0 0.0
        %503 = vmatmul.mubr.f32.gmra.mxu0 %v318
        %v504 = vpop.f32.mrf.mxu0
        %v505 = vadd.f32 0.0, %v504
        %v506 = vpop.f32.mrf.mxu0
        %507 = vmatprep.mubr.f32.mxu0 0.0
        %508 = vmatmul.mubr.f32.gmra.mxu0 %v319
        %v509 = vpop.f32.mrf.mxu0
        %v510 = vadd.f32 0.0, %v509
        %v511 = vpop.f32.mrf.mxu0
        %512 = vmatprep.mubr.f32.mxu0 0.0
        %513 = vmatmul.mubr.f32.gmra.mxu0 %v320
        %v514 = vpop.f32.mrf.mxu0
        %v515 = vadd.f32 0.0, %v514
        %v516 = vpop.f32.mrf.mxu0
        %517 = vmatprep.mubr.f32.mxu0 0.0
        %518 = vmatmul.mubr.f32.gmra.mxu0 %v321
        %v519 = vpop.f32.mrf.mxu0
        %v520 = vadd.f32 0.0, %v519
        %v521 = vpop.f32.mrf.mxu0
        %522 = vmatprep.mubr.f32.mxu0 0.0
        %523 = vmatmul.mubr.f32.gmra.mxu0 %v322
        %v524 = vpop.f32.mrf.mxu0
        %v525 = vadd.f32 0.0, %v524
        %v526 = vpop.f32.mrf.mxu0
        %527 = vmatprep.mubr.f32.mxu0 0.0
        %528 = vmatmul.mubr.f32.gmra.mxu0 %v323
        %v529 = vpop.f32.mrf.mxu0
        %v530 = vadd.f32 0.0, %v529
        %v531 = vpop.f32.mrf.mxu0
        %532 = vmatprep.mubr.f32.mxu0 0.0
        %533 = vmatmul.mubr.f32.gmra.mxu0 %v324
        %v534 = vpop.f32.mrf.mxu0
        %v535 = vadd.f32 0.0, %v534
        %v536 = vpop.f32.mrf.mxu0
        %537 = vmatprep.mubr.f32.mxu0 0.0
        %538 = vmatmul.mubr.f32.gmra.mxu0 %v325
        %v539 = vpop.f32.mrf.mxu0
        %v540 = vadd.f32 0.0, %v539
        %v541 = vpop.f32.mrf.mxu0
        %542 = vmatprep.mubr.f32.mxu0 0.0
        %543 = vmatmul.mubr.f32.gmra.mxu0 %v326
        %v544 = vpop.f32.mrf.mxu0
        %v545 = vadd.f32 0.0, %v544
        %v546 = vpop.f32.mrf.mxu0
        %547 = vmatprep.mubr.f32.mxu0 0.0
        %548 = vmatmul.mubr.f32.gmra.mxu0 %v327
        %v549 = vpop.f32.mrf.mxu0
        %v550 = vadd.f32 0.0, %v549
        %v551 = vpop.f32.mrf.mxu0
        %552 = vdwg.mxu0
        %v553 = vmul.f32 %v395, 0.0078125
        %v554 = vmul.f32 %v400, 0.0078125
        %v555 = vmul.f32 %v405, 0.0078125
        %v556 = vmul.f32 %v410, 0.0078125
        %v557 = vmul.f32 %v415, 0.0078125
        %v558 = vmul.f32 %v420, 0.0078125
        %v559 = vmul.f32 %v425, 0.0078125
        %v560 = vmul.f32 %v430, 0.0078125
        %v561 = vmul.f32 %v435, 0.0078125
        %v562 = vmul.f32 %v440, 0.0078125
        %v563 = vmul.f32 %v445, 0.0078125
        %v564 = vmul.f32 %v450, 0.0078125
        %v565 = vmul.f32 %v455, 0.0078125
        %v566 = vmul.f32 %v460, 0.0078125
        %v567 = vmul.f32 %v465, 0.0078125
        %v568 = vmul.f32 %v470, 0.0078125
        %v569 = vmul.f32 %v475, 0.0078125
        %v570 = vmul.f32 %v480, 0.0078125
        %v571 = vmul.f32 %v485, 0.0078125
        %v572 = vmul.f32 %v490, 0.0078125
        %v573 = vmul.f32 %v495, 0.0078125
        %v574 = vmul.f32 %v500, 0.0078125
        %v575 = vmul.f32 %v505, 0.0078125
        %v576 = vmul.f32 %v510, 0.0078125
        %v577 = vmul.f32 %v515, 0.0078125
        %v578 = vmul.f32 %v520, 0.0078125
        %v579 = vmul.f32 %v525, 0.0078125
        %v580 = vmul.f32 %v530, 0.0078125
        %v581 = vmul.f32 %v535, 0.0078125
        %v582 = vmul.f32 %v540, 0.0078125
        %v583 = vmul.f32 %v545, 0.0078125
        %v584 = vmul.f32 %v550, 0.0078125
        %v585 = vmul.f32 %v296, %v296
        %v586 = vmul.f32 %v297, %v297
        %v587 = vmul.f32 %v298, %v298
        %v588 = vmul.f32 %v299, %v299
        %v589 = vmul.f32 %v300, %v300
        %v590 = vmul.f32 %v301, %v301
        %v591 = vmul.f32 %v302, %v302
        %v592 = vmul.f32 %v303, %v303
        %v593 = vmul.f32 %v304, %v304
        %v594 = vmul.f32 %v305, %v305
        %v595 = vmul.f32 %v306, %v306
        %v596 = vmul.f32 %v307, %v307
        %v597 = vmul.f32 %v308, %v308
        %v598 = vmul.f32 %v309, %v309
        %v599 = vmul.f32 %v310, %v310
        %v600 = vmul.f32 %v311, %v311
        %v601 = vmul.f32 %v312, %v312
        %v602 = vmul.f32 %v313, %v313
        %v603 = vmul.f32 %v314, %v314
        %v604 = vmul.f32 %v315, %v315
        %v605 = vmul.f32 %v316, %v316
        %v606 = vmul.f32 %v317, %v317
        %v607 = vmul.f32 %v318, %v318
        %v608 = vmul.f32 %v319, %v319
        %v609 = vmul.f32 %v320, %v320
        %v610 = vmul.f32 %v321, %v321
        %v611 = vmul.f32 %v322, %v322
        %v612 = vmul.f32 %v323, %v323
        %v613 = vmul.f32 %v324, %v324
        %v614 = vmul.f32 %v325, %v325
        %v615 = vmul.f32 %v326, %v326
        %v616 = vmul.f32 %v327, %v327
        %617 = vmatprep.subr.mxu0 0.0
        %618 = vmatpush1.msra.mxu0 1.0
        %619 = vmatprep.subr.mxu0 0.0
        %620 = vmatpush1.msra.mxu0 1.0
        %621 = vmatprep.subr.mxu0 0.0
        %622 = vmatpush1.msra.mxu0 1.0
        %623 = vmatprep.subr.mxu0 0.0
        %624 = vmatpush1.msra.mxu0 1.0
        %625 = vmatprep.subr.mxu0 0.0
        %626 = vmatpush1.msra.mxu0 1.0
        %627 = vmatprep.subr.mxu0 0.0
        %628 = vmatpush1.msra.mxu0 1.0
        %629 = vmatprep.subr.mxu0 0.0
        %630 = vmatpush1.msra.mxu0 1.0
        %631 = vmatprep.subr.mxu0 0.0
        %632 = vmatpush1.msra.mxu0 1.0
        %633 = vmatprep.subr.mxu0 0.0
        %634 = vmatpush1.msra.mxu0 1.0
        %635 = vmatprep.subr.mxu0 0.0
        %636 = vmatpush1.msra.mxu0 1.0
        %637 = vmatprep.subr.mxu0 0.0
        %638 = vmatpush1.msra.mxu0 1.0
        %639 = vmatprep.subr.mxu0 0.0
        %640 = vmatpush1.msra.mxu0 1.0
        %641 = vmatprep.subr.mxu0 0.0
        %642 = vmatpush1.msra.mxu0 1.0
        %643 = vmatprep.subr.mxu0 0.0
        %644 = vmatpush1.msra.mxu0 1.0
        %645 = vmatprep.subr.mxu0 0.0
        %646 = vmatpush1.msra.mxu0 1.0
        %647 = vmatprep.subr.mxu0 0.0
        %648 = vmatpush1.msra.mxu0 1.0
        %649 = vmatprep.subr.mxu0 0.0
        %650 = vmatpush2.msra.mxu0 0.0
        %651 = vmatprep.subr.mxu0 0.0
        %652 = vmatpush2.msra.mxu0 0.0
        %653 = vmatprep.subr.mxu0 0.0
        %654 = vmatpush2.msra.mxu0 0.0
        %655 = vmatprep.subr.mxu0 0.0
        %656 = vmatpush2.msra.mxu0 0.0
        %657 = vmatprep.subr.mxu0 0.0
        %658 = vmatpush2.msra.mxu0 0.0
        %659 = vmatprep.subr.mxu0 0.0
        %660 = vmatpush2.msra.mxu0 0.0
        %661 = vmatprep.subr.mxu0 0.0
        %662 = vmatpush2.msra.mxu0 0.0
        %663 = vmatprep.subr.mxu0 0.0
        %664 = vmatpush2.msra.mxu0 0.0
        %665 = vmatprep.subr.mxu0 0.0
        %666 = vmatpush2.msra.mxu0 0.0
        %667 = vmatprep.subr.mxu0 0.0
        %668 = vmatpush2.msra.mxu0 0.0
        %669 = vmatprep.subr.mxu0 0.0
        %670 = vmatpush2.msra.mxu0 0.0
        %671 = vmatprep.subr.mxu0 0.0
        %672 = vmatpush2.msra.mxu0 0.0
        %673 = vmatprep.subr.mxu0 0.0
        %674 = vmatpush2.msra.mxu0 0.0
        %675 = vmatprep.subr.mxu0 0.0
        %676 = vmatpush2.msra.mxu0 0.0
        %677 = vmatprep.subr.mxu0 0.0
        %678 = vmatpush2.msra.mxu0 0.0
        %679 = vmatprep.subr.mxu0 0.0
        %680 = vmatpush2.msra.mxu0 0.0
        %681 = vmatprep.mubr.f32.mxu0 0.0
        %682 = vmatmul.mubr.f32.gmra.mxu0 %v585
        %v683 = vpop.f32.mrf.mxu0
        %v684 = vadd.f32 0.0, %v683
        %v685 = vpop.f32.mrf.mxu0
        %686 = vmatprep.mubr.f32.mxu0 0.0
        %687 = vmatmul.mubr.f32.gmra.mxu0 %v586
        %v688 = vpop.f32.mrf.mxu0
        %v689 = vadd.f32 0.0, %v688
        %v690 = vpop.f32.mrf.mxu0
        %691 = vmatprep.mubr.f32.mxu0 0.0
        %692 = vmatmul.mubr.f32.gmra.mxu0 %v587
        %v693 = vpop.f32.mrf.mxu0
        %v694 = vadd.f32 0.0, %v693
        %v695 = vpop.f32.mrf.mxu0
        %696 = vmatprep.mubr.f32.mxu0 0.0
        %697 = vmatmul.mubr.f32.gmra.mxu0 %v588
        %v698 = vpop.f32.mrf.mxu0
        %v699 = vadd.f32 0.0, %v698
        %v700 = vpop.f32.mrf.mxu0
        %701 = vmatprep.mubr.f32.mxu0 0.0
        %702 = vmatmul.mubr.f32.gmra.mxu0 %v589
        %v703 = vpop.f32.mrf.mxu0
        %v704 = vadd.f32 0.0, %v703
        %v705 = vpop.f32.mrf.mxu0
        %706 = vmatprep.mubr.f32.mxu0 0.0
        %707 = vmatmul.mubr.f32.gmra.mxu0 %v590
        %v708 = vpop.f32.mrf.mxu0
        %v709 = vadd.f32 0.0, %v708
        %v710 = vpop.f32.mrf.mxu0
        %711 = vmatprep.mubr.f32.mxu0 0.0
        %712 = vmatmul.mubr.f32.gmra.mxu0 %v591
        %v713 = vpop.f32.mrf.mxu0
        %v714 = vadd.f32 0.0, %v713
        %v715 = vpop.f32.mrf.mxu0
        %716 = vmatprep.mubr.f32.mxu0 0.0
        %717 = vmatmul.mubr.f32.gmra.mxu0 %v592
        %v718 = vpop.f32.mrf.mxu0
        %v719 = vadd.f32 0.0, %v718
        %v720 = vpop.f32.mrf.mxu0
        %721 = vmatprep.mubr.f32.mxu0 0.0
        %722 = vmatmul.mubr.f32.gmra.mxu0 %v593
        %v723 = vpop.f32.mrf.mxu0
        %v724 = vadd.f32 0.0, %v723
        %v725 = vpop.f32.mrf.mxu0
        %726 = vmatprep.mubr.f32.mxu0 0.0
        %727 = vmatmul.mubr.f32.gmra.mxu0 %v594
        %v728 = vpop.f32.mrf.mxu0
        %v729 = vadd.f32 0.0, %v728
        %v730 = vpop.f32.mrf.mxu0
        %731 = vmatprep.mubr.f32.mxu0 0.0
        %732 = vmatmul.mubr.f32.gmra.mxu0 %v595
        %v733 = vpop.f32.mrf.mxu0
        %v734 = vadd.f32 0.0, %v733
        %v735 = vpop.f32.mrf.mxu0
        %736 = vmatprep.mubr.f32.mxu0 0.0
        %737 = vmatmul.mubr.f32.gmra.mxu0 %v596
        %v738 = vpop.f32.mrf.mxu0
        %v739 = vadd.f32 0.0, %v738
        %v740 = vpop.f32.mrf.mxu0
        %741 = vmatprep.mubr.f32.mxu0 0.0
        %742 = vmatmul.mubr.f32.gmra.mxu0 %v597
        %v743 = vpop.f32.mrf.mxu0
        %v744 = vadd.f32 0.0, %v743
        %v745 = vpop.f32.mrf.mxu0
        %746 = vmatprep.mubr.f32.mxu0 0.0
        %747 = vmatmul.mubr.f32.gmra.mxu0 %v598
        %v748 = vpop.f32.mrf.mxu0
        %v749 = vadd.f32 0.0, %v748
        %v750 = vpop.f32.mrf.mxu0
        %751 = vmatprep.mubr.f32.mxu0 0.0
        %752 = vmatmul.mubr.f32.gmra.mxu0 %v599
        %v753 = vpop.f32.mrf.mxu0
        %v754 = vadd.f32 0.0, %v753
        %v755 = vpop.f32.mrf.mxu0
        %756 = vmatprep.mubr.f32.mxu0 0.0
        %757 = vmatmul.mubr.f32.gmra.mxu0 %v600
        %v758 = vpop.f32.mrf.mxu0
        %v759 = vadd.f32 0.0, %v758
        %v760 = vpop.f32.mrf.mxu0
        %761 = vmatprep.mubr.f32.mxu0 0.0
        %762 = vmatmul.mubr.f32.gmra.mxu0 %v601
        %v763 = vpop.f32.mrf.mxu0
        %v764 = vadd.f32 0.0, %v763
        %v765 = vpop.f32.mrf.mxu0
        %766 = vmatprep.mubr.f32.mxu0 0.0
        %767 = vmatmul.mubr.f32.gmra.mxu0 %v602
        %v768 = vpop.f32.mrf.mxu0
        %v769 = vadd.f32 0.0, %v768
        %v770 = vpop.f32.mrf.mxu0
        %771 = vmatprep.mubr.f32.mxu0 0.0
        %772 = vmatmul.mubr.f32.gmra.mxu0 %v603
        %v773 = vpop.f32.mrf.mxu0
        %v774 = vadd.f32 0.0, %v773
        %v775 = vpop.f32.mrf.mxu0
        %776 = vmatprep.mubr.f32.mxu0 0.0
        %777 = vmatmul.mubr.f32.gmra.mxu0 %v604
        %v778 = vpop.f32.mrf.mxu0
        %v779 = vadd.f32 0.0, %v778
        %v780 = vpop.f32.mrf.mxu0
        %781 = vmatprep.mubr.f32.mxu0 0.0
        %782 = vmatmul.mubr.f32.gmra.mxu0 %v605
        %v783 = vpop.f32.mrf.mxu0
        %v784 = vadd.f32 0.0, %v783
        %v785 = vpop.f32.mrf.mxu0
        %786 = vmatprep.mubr.f32.mxu0 0.0
        %787 = vmatmul.mubr.f32.gmra.mxu0 %v606
        %v788 = vpop.f32.mrf.mxu0
        %v789 = vadd.f32 0.0, %v788
        %v790 = vpop.f32.mrf.mxu0
        %791 = vmatprep.mubr.f32.mxu0 0.0
        %792 = vmatmul.mubr.f32.gmra.mxu0 %v607
        %v793 = vpop.f32.mrf.mxu0
        %v794 = vadd.f32 0.0, %v793
        %v795 = vpop.f32.mrf.mxu0
        %796 = vmatprep.mubr.f32.mxu0 0.0
        %797 = vmatmul.mubr.f32.gmra.mxu0 %v608
        %v798 = vpop.f32.mrf.mxu0
        %v799 = vadd.f32 0.0, %v798
        %v800 = vpop.f32.mrf.mxu0
        %801 = vmatprep.mubr.f32.mxu0 0.0
        %802 = vmatmul.mubr.f32.gmra.mxu0 %v609
        %v803 = vpop.f32.mrf.mxu0
        %v804 = vadd.f32 0.0, %v803
        %v805 = vpop.f32.mrf.mxu0
        %806 = vmatprep.mubr.f32.mxu0 0.0
        %807 = vmatmul.mubr.f32.gmra.mxu0 %v610
        %v808 = vpop.f32.mrf.mxu0
        %v809 = vadd.f32 0.0, %v808
        %v810 = vpop.f32.mrf.mxu0
        %811 = vmatprep.mubr.f32.mxu0 0.0
        %812 = vmatmul.mubr.f32.gmra.mxu0 %v611
        %v813 = vpop.f32.mrf.mxu0
        %v814 = vadd.f32 0.0, %v813
        %v815 = vpop.f32.mrf.mxu0
        %816 = vmatprep.mubr.f32.mxu0 0.0
        %817 = vmatmul.mubr.f32.gmra.mxu0 %v612
        %v818 = vpop.f32.mrf.mxu0
        %v819 = vadd.f32 0.0, %v818
        %v820 = vpop.f32.mrf.mxu0
        %821 = vmatprep.mubr.f32.mxu0 0.0
        %822 = vmatmul.mubr.f32.gmra.mxu0 %v613
        %v823 = vpop.f32.mrf.mxu0
        %v824 = vadd.f32 0.0, %v823
        %v825 = vpop.f32.mrf.mxu0
        %826 = vmatprep.mubr.f32.mxu0 0.0
        %827 = vmatmul.mubr.f32.gmra.mxu0 %v614
        %v828 = vpop.f32.mrf.mxu0
        %v829 = vadd.f32 0.0, %v828
        %v830 = vpop.f32.mrf.mxu0
        %831 = vmatprep.mubr.f32.mxu0 0.0
        %832 = vmatmul.mubr.f32.gmra.mxu0 %v615
        %v833 = vpop.f32.mrf.mxu0
        %v834 = vadd.f32 0.0, %v833
        %v835 = vpop.f32.mrf.mxu0
        %836 = vmatprep.mubr.f32.mxu0 0.0
        %837 = vmatmul.mubr.f32.gmra.mxu0 %v616
        %v838 = vpop.f32.mrf.mxu0
        %v839 = vadd.f32 0.0, %v838
        %v840 = vpop.f32.mrf.mxu0
        %841 = vdwg.mxu0
        %v842 = vmul.f32 %v684, 0.0078125
        %v843 = vmul.f32 %v689, 0.0078125
        %v844 = vmul.f32 %v694, 0.0078125
        %v845 = vmul.f32 %v699, 0.0078125
        %v846 = vmul.f32 %v704, 0.0078125
        %v847 = vmul.f32 %v709, 0.0078125
        %v848 = vmul.f32 %v714, 0.0078125
        %v849 = vmul.f32 %v719, 0.0078125
        %v850 = vmul.f32 %v724, 0.0078125
        %v851 = vmul.f32 %v729, 0.0078125
        %v852 = vmul.f32 %v734, 0.0078125
        %v853 = vmul.f32 %v739, 0.0078125
        %v854 = vmul.f32 %v744, 0.0078125
        %v855 = vmul.f32 %v749, 0.0078125
        %v856 = vmul.f32 %v754, 0.0078125
        %v857 = vmul.f32 %v759, 0.0078125
        %v858 = vmul.f32 %v764, 0.0078125
        %v859 = vmul.f32 %v769, 0.0078125
        %v860 = vmul.f32 %v774, 0.0078125
        %v861 = vmul.f32 %v779, 0.0078125
        %v862 = vmul.f32 %v784, 0.0078125
        %v863 = vmul.f32 %v789, 0.0078125
        %v864 = vmul.f32 %v794, 0.0078125
        %v865 = vmul.f32 %v799, 0.0078125
        %v866 = vmul.f32 %v804, 0.0078125
        %v867 = vmul.f32 %v809, 0.0078125
        %v868 = vmul.f32 %v814, 0.0078125
        %v869 = vmul.f32 %v819, 0.0078125
        %v870 = vmul.f32 %v824, 0.0078125
        %v871 = vmul.f32 %v829, 0.0078125
        %v872 = vmul.f32 %v834, 0.0078125
        %v873 = vmul.f32 %v839, 0.0078125
        %v874 = vmul.f32 %v553, %v553
        %v875 = vmul.f32 %v554, %v554
        %v876 = vmul.f32 %v555, %v555
        %v877 = vmul.f32 %v556, %v556
        %v878 = vmul.f32 %v557, %v557
        %v879 = vmul.f32 %v558, %v558
        %v880 = vmul.f32 %v559, %v559
        %v881 = vmul.f32 %v560, %v560
        %v882 = vmul.f32 %v561, %v561
        %v883 = vmul.f32 %v562, %v562
        %v884 = vmul.f32 %v563, %v563
        %v885 = vmul.f32 %v564, %v564
        %v886 = vmul.f32 %v565, %v565
        %v887 = vmul.f32 %v566, %v566
        %v888 = vmul.f32 %v567, %v567
        %v889 = vmul.f32 %v568, %v568
        %v890 = vmul.f32 %v569, %v569
        %v891 = vmul.f32 %v570, %v570
        %v892 = vmul.f32 %v571, %v571
        %v893 = vmul.f32 %v572, %v572
        %v894 = vmul.f32 %v573, %v573
        %v895 = vmul.f32 %v574, %v574
        %v896 = vmul.f32 %v575, %v575
        %v897 = vmul.f32 %v576, %v576
        %v898 = vmul.f32 %v577, %v577
        %v899 = vmul.f32 %v578, %v578
        %v900 = vmul.f32 %v579, %v579
        %v901 = vmul.f32 %v580, %v580
        %v902 = vmul.f32 %v581, %v581
        %v903 = vmul.f32 %v582, %v582
        %v904 = vmul.f32 %v583, %v583
        %v905 = vmul.f32 %v584, %v584
        %v906 = vsub.f32 %v842, %v874
        %v907 = vsub.f32 %v843, %v875
        %v908 = vsub.f32 %v844, %v876
        %v909 = vsub.f32 %v845, %v877
        %v910 = vsub.f32 %v846, %v878
        %v911 = vsub.f32 %v847, %v879
        %v912 = vsub.f32 %v848, %v880
        %v913 = vsub.f32 %v849, %v881
        %v914 = vsub.f32 %v850, %v882
        %v915 = vsub.f32 %v851, %v883
        %v916 = vsub.f32 %v852, %v884
        %v917 = vsub.f32 %v853, %v885
        %v918 = vsub.f32 %v854, %v886
        %v919 = vsub.f32 %v855, %v887
        %v920 = vsub.f32 %v856, %v888
        %v921 = vsub.f32 %v857, %v889
        %v922 = vsub.f32 %v858, %v890
        %v923 = vsub.f32 %v859, %v891
        %v924 = vsub.f32 %v860, %v892
        %v925 = vsub.f32 %v861, %v893
        %v926 = vsub.f32 %v862, %v894
        %v927 = vsub.f32 %v863, %v895
        %v928 = vsub.f32 %v864, %v896
        %v929 = vsub.f32 %v865, %v897
        %v930 = vsub.f32 %v866, %v898
        %v931 = vsub.f32 %v867, %v899
        %v932 = vsub.f32 %v868, %v900
        %v933 = vsub.f32 %v869, %v901
        %v934 = vsub.f32 %v870, %v902
        %v935 = vsub.f32 %v871, %v903
        %v936 = vsub.f32 %v872, %v904
        %v937 = vsub.f32 %v873, %v905
        %939 = vset.pattern.permute.xlu0 0
        %940 = vperm.xlu0 %939, %v553
        %v941 = vpop.permute.xlu0 %940
        %944 = vset.pattern.permute.xlu0 0
        %945 = vperm.xlu0 %944, %v554
        %v946 = vpop.permute.xlu0 %945
        %949 = vset.pattern.permute.xlu0 0
        %950 = vperm.xlu0 %949, %v555
        %v951 = vpop.permute.xlu0 %950
        %954 = vset.pattern.permute.xlu0 0
        %955 = vperm.xlu0 %954, %v556
        %v956 = vpop.permute.xlu0 %955
        %959 = vset.pattern.permute.xlu0 0
        %960 = vperm.xlu0 %959, %v557
        %v961 = vpop.permute.xlu0 %960
        %964 = vset.pattern.permute.xlu0 0
        %965 = vperm.xlu0 %964, %v558
        %v966 = vpop.permute.xlu0 %965
        %969 = vset.pattern.permute.xlu0 0
        %970 = vperm.xlu0 %969, %v559
        %v971 = vpop.permute.xlu0 %970
        %974 = vset.pattern.permute.xlu0 0
        %975 = vperm.xlu0 %974, %v560
        %v976 = vpop.permute.xlu0 %975
        %979 = vset.pattern.permute.xlu0 0
        %980 = vperm.xlu0 %979, %v561
        %v981 = vpop.permute.xlu0 %980
        %984 = vset.pattern.permute.xlu0 0
        %985 = vperm.xlu0 %984, %v562
        %v986 = vpop.permute.xlu0 %985
        %989 = vset.pattern.permute.xlu0 0
        %990 = vperm.xlu0 %989, %v563
        %v991 = vpop.permute.xlu0 %990
        %994 = vset.pattern.permute.xlu0 0
        %995 = vperm.xlu0 %994, %v564
        %v996 = vpop.permute.xlu0 %995
        %999 = vset.pattern.permute.xlu0 0
        %1000 = vperm.xlu0 %999, %v565
        %v1001 = vpop.permute.xlu0 %1000
        %1004 = vset.pattern.permute.xlu0 0
        %1005 = vperm.xlu0 %1004, %v566
        %v1006 = vpop.permute.xlu0 %1005
        %1009 = vset.pattern.permute.xlu0 0
        %1010 = vperm.xlu0 %1009, %v567
        %v1011 = vpop.permute.xlu0 %1010
        %1014 = vset.pattern.permute.xlu0 0
        %1015 = vperm.xlu0 %1014, %v568
        %v1016 = vpop.permute.xlu0 %1015
        %1019 = vset.pattern.permute.xlu0 0
        %1020 = vperm.xlu0 %1019, %v569
        %v1021 = vpop.permute.xlu0 %1020
        %1024 = vset.pattern.permute.xlu0 0
        %1025 = vperm.xlu0 %1024, %v570
        %v1026 = vpop.permute.xlu0 %1025
        %1029 = vset.pattern.permute.xlu0 0
        %1030 = vperm.xlu0 %1029, %v571
        %v1031 = vpop.permute.xlu0 %1030
        %1034 = vset.pattern.permute.xlu0 0
        %1035 = vperm.xlu0 %1034, %v572
        %v1036 = vpop.permute.xlu0 %1035
        %1039 = vset.pattern.permute.xlu0 0
        %1040 = vperm.xlu0 %1039, %v573
        %v1041 = vpop.permute.xlu0 %1040
        %1044 = vset.pattern.permute.xlu0 0
        %1045 = vperm.xlu0 %1044, %v574
        %v1046 = vpop.permute.xlu0 %1045
        %1049 = vset.pattern.permute.xlu0 0
        %1050 = vperm.xlu0 %1049, %v575
        %v1051 = vpop.permute.xlu0 %1050
        %1054 = vset.pattern.permute.xlu0 0
        %1055 = vperm.xlu0 %1054, %v576
        %v1056 = vpop.permute.xlu0 %1055
        %1059 = vset.pattern.permute.xlu0 0
        %1060 = vperm.xlu0 %1059, %v577
        %v1061 = vpop.permute.xlu0 %1060
        %1064 = vset.pattern.permute.xlu0 0
        %1065 = vperm.xlu0 %1064, %v578
        %v1066 = vpop.permute.xlu0 %1065
        %1069 = vset.pattern.permute.xlu0 0
        %1070 = vperm.xlu0 %1069, %v579
        %v1071 = vpop.permute.xlu0 %1070
        %1074 = vset.pattern.permute.xlu0 0
        %1075 = vperm.xlu0 %1074, %v580
        %v1076 = vpop.permute.xlu0 %1075
        %1079 = vset.pattern.permute.xlu0 0
        %1080 = vperm.xlu0 %1079, %v581
        %v1081 = vpop.permute.xlu0 %1080
        %1084 = vset.pattern.permute.xlu0 0
        %1085 = vperm.xlu0 %1084, %v582
        %v1086 = vpop.permute.xlu0 %1085
        %1089 = vset.pattern.permute.xlu0 0
        %1090 = vperm.xlu0 %1089, %v583
        %v1091 = vpop.permute.xlu0 %1090
        %1094 = vset.pattern.permute.xlu0 0
        %1095 = vperm.xlu0 %1094, %v584
        %v1096 = vpop.permute.xlu0 %1095
        %v1098 = vsub.f32 %v296, %v941
        %v1099 = vsub.f32 %v297, %v946
        %v1100 = vsub.f32 %v298, %v951
        %v1101 = vsub.f32 %v299, %v956
        %v1102 = vsub.f32 %v300, %v961
        %v1103 = vsub.f32 %v301, %v966
        %v1104 = vsub.f32 %v302, %v971
        %v1105 = vsub.f32 %v303, %v976
        %v1106 = vsub.f32 %v304, %v981
        %v1107 = vsub.f32 %v305, %v986
        %v1108 = vsub.f32 %v306, %v991
        %v1109 = vsub.f32 %v307, %v996
        %v1110 = vsub.f32 %v308, %v1001
        %v1111 = vsub.f32 %v309, %v1006
        %v1112 = vsub.f32 %v310, %v1011
        %v1113 = vsub.f32 %v311, %v1016
        %v1114 = vsub.f32 %v312, %v1021
        %v1115 = vsub.f32 %v313, %v1026
        %v1116 = vsub.f32 %v314, %v1031
        %v1117 = vsub.f32 %v315, %v1036
        %v1118 = vsub.f32 %v316, %v1041
        %v1119 = vsub.f32 %v317, %v1046
        %v1120 = vsub.f32 %v318, %v1051
        %v1121 = vsub.f32 %v319, %v1056
        %v1122 = vsub.f32 %v320, %v1061
        %v1123 = vsub.f32 %v321, %v1066
        %v1124 = vsub.f32 %v322, %v1071
        %v1125 = vsub.f32 %v323, %v1076
        %v1126 = vsub.f32 %v324, %v1081
        %v1127 = vsub.f32 %v325, %v1086
        %v1128 = vsub.f32 %v326, %v1091
        %v1129 = vsub.f32 %v327, %v1096
        %v1130 = vadd.f32 %v906, 1e-05
        %v1131 = vadd.f32 %v907, 1e-05
        %v1132 = vadd.f32 %v908, 1e-05
        %v1133 = vadd.f32 %v909, 1e-05
        %v1134 = vadd.f32 %v910, 1e-05
        %v1135 = vadd.f32 %v911, 1e-05
        %v1136 = vadd.f32 %v912, 1e-05
        %v1137 = vadd.f32 %v913, 1e-05
        %v1138 = vadd.f32 %v914, 1e-05
        %v1139 = vadd.f32 %v915, 1e-05
        %v1140 = vadd.f32 %v916, 1e-05
        %v1141 = vadd.f32 %v917, 1e-05
        %v1142 = vadd.f32 %v918, 1e-05
        %v1143 = vadd.f32 %v919, 1e-05
        %v1144 = vadd.f32 %v920, 1e-05
        %v1145 = vadd.f32 %v921, 1e-05
        %v1146 = vadd.f32 %v922, 1e-05
        %v1147 = vadd.f32 %v923, 1e-05
        %v1148 = vadd.f32 %v924, 1e-05
        %v1149 = vadd.f32 %v925, 1e-05
        %v1150 = vadd.f32 %v926, 1e-05
        %v1151 = vadd.f32 %v927, 1e-05
        %v1152 = vadd.f32 %v928, 1e-05
        %v1153 = vadd.f32 %v929, 1e-05
        %v1154 = vadd.f32 %v930, 1e-05
        %v1155 = vadd.f32 %v931, 1e-05
        %v1156 = vadd.f32 %v932, 1e-05
        %v1157 = vadd.f32 %v933, 1e-05
        %v1158 = vadd.f32 %v934, 1e-05
        %v1159 = vadd.f32 %v935, 1e-05
        %v1160 = vadd.f32 %v936, 1e-05
        %v1161 = vadd.f32 %v937, 1e-05
        %v1162 = vrsqrt.pop %v1130
        %v1163 = vrsqrt.pop %v1131
        %v1164 = vrsqrt.pop %v1132
        %v1165 = vrsqrt.pop %v1133
        %v1166 = vrsqrt.pop %v1134
        %v1167 = vrsqrt.pop %v1135
        %v1168 = vrsqrt.pop %v1136
        %v1169 = vrsqrt.pop %v1137
        %v1170 = vrsqrt.pop %v1138
        %v1171 = vrsqrt.pop %v1139
        %v1172 = vrsqrt.pop %v1140
        %v1173 = vrsqrt.pop %v1141
        %v1174 = vrsqrt.pop %v1142
        %v1175 = vrsqrt.pop %v1143
        %v1176 = vrsqrt.pop %v1144
        %v1177 = vrsqrt.pop %v1145
        %v1178 = vrsqrt.pop %v1146
        %v1179 = vrsqrt.pop %v1147
        %v1180 = vrsqrt.pop %v1148
        %v1181 = vrsqrt.pop %v1149
        %v1182 = vrsqrt.pop %v1150
        %v1183 = vrsqrt.pop %v1151
        %v1184 = vrsqrt.pop %v1152
        %v1185 = vrsqrt.pop %v1153
        %v1186 = vrsqrt.pop %v1154
        %v1187 = vrsqrt.pop %v1155
        %v1188 = vrsqrt.pop %v1156
        %v1189 = vrsqrt.pop %v1157
        %v1190 = vrsqrt.pop %v1158
        %v1191 = vrsqrt.pop %v1159
        %v1192 = vrsqrt.pop %v1160
        %v1193 = vrsqrt.pop %v1161
        %1195 = vset.pattern.permute.xlu0 0
        %1196 = vperm.xlu0 %1195, %v1162
        %v1197 = vpop.permute.xlu0 %1196
        %1200 = vset.pattern.permute.xlu0 0
        %1201 = vperm.xlu0 %1200, %v1163
        %v1202 = vpop.permute.xlu0 %1201
        %1205 = vset.pattern.permute.xlu0 0
        %1206 = vperm.xlu0 %1205, %v1164
        %v1207 = vpop.permute.xlu0 %1206
        %1210 = vset.pattern.permute.xlu0 0
        %1211 = vperm.xlu0 %1210, %v1165
        %v1212 = vpop.permute.xlu0 %1211
        %1215 = vset.pattern.permute.xlu0 0
        %1216 = vperm.xlu0 %1215, %v1166
        %v1217 = vpop.permute.xlu0 %1216
        %1220 = vset.pattern.permute.xlu0 0
        %1221 = vperm.xlu0 %1220, %v1167
        %v1222 = vpop.permute.xlu0 %1221
        %1225 = vset.pattern.permute.xlu0 0
        %1226 = vperm.xlu0 %1225, %v1168
        %v1227 = vpop.permute.xlu0 %1226
        %1230 = vset.pattern.permute.xlu0 0
        %1231 = vperm.xlu0 %1230, %v1169
        %v1232 = vpop.permute.xlu0 %1231
        %1235 = vset.pattern.permute.xlu0 0
        %1236 = vperm.xlu0 %1235, %v1170
        %v1237 = vpop.permute.xlu0 %1236
        %1240 = vset.pattern.permute.xlu0 0
        %1241 = vperm.xlu0 %1240, %v1171
        %v1242 = vpop.permute.xlu0 %1241
        %1245 = vset.pattern.permute.xlu0 0
        %1246 = vperm.xlu0 %1245, %v1172
        %v1247 = vpop.permute.xlu0 %1246
        %1250 = vset.pattern.permute.xlu0 0
        %1251 = vperm.xlu0 %1250, %v1173
        %v1252 = vpop.permute.xlu0 %1251
        %1255 = vset.pattern.permute.xlu0 0
        %1256 = vperm.xlu0 %1255, %v1174
        %v1257 = vpop.permute.xlu0 %1256
        %1260 = vset.pattern.permute.xlu0 0
        %1261 = vperm.xlu0 %1260, %v1175
        %v1262 = vpop.permute.xlu0 %1261
        %1265 = vset.pattern.permute.xlu0 0
        %1266 = vperm.xlu0 %1265, %v1176
        %v1267 = vpop.permute.xlu0 %1266
        %1270 = vset.pattern.permute.xlu0 0
        %1271 = vperm.xlu0 %1270, %v1177
        %v1272 = vpop.permute.xlu0 %1271
        %1275 = vset.pattern.permute.xlu0 0
        %1276 = vperm.xlu0 %1275, %v1178
        %v1277 = vpop.permute.xlu0 %1276
        %1280 = vset.pattern.permute.xlu0 0
        %1281 = vperm.xlu0 %1280, %v1179
        %v1282 = vpop.permute.xlu0 %1281
        %1285 = vset.pattern.permute.xlu0 0
        %1286 = vperm.xlu0 %1285, %v1180
        %v1287 = vpop.permute.xlu0 %1286
        %1290 = vset.pattern.permute.xlu0 0
        %1291 = vperm.xlu0 %1290, %v1181
        %v1292 = vpop.permute.xlu0 %1291
        %1295 = vset.pattern.permute.xlu0 0
        %1296 = vperm.xlu0 %1295, %v1182
        %v1297 = vpop.permute.xlu0 %1296
        %1300 = vset.pattern.permute.xlu0 0
        %1301 = vperm.xlu0 %1300, %v1183
        %v1302 = vpop.permute.xlu0 %1301
        %1305 = vset.pattern.permute.xlu0 0
        %1306 = vperm.xlu0 %1305, %v1184
        %v1307 = vpop.permute.xlu0 %1306
        %1310 = vset.pattern.permute.xlu0 0
        %1311 = vperm.xlu0 %1310, %v1185
        %v1312 = vpop.permute.xlu0 %1311
        %1315 = vset.pattern.permute.xlu0 0
        %1316 = vperm.xlu0 %1315, %v1186
        %v1317 = vpop.permute.xlu0 %1316
        %1320 = vset.pattern.permute.xlu0 0
        %1321 = vperm.xlu0 %1320, %v1187
        %v1322 = vpop.permute.xlu0 %1321
        %1325 = vset.pattern.permute.xlu0 0
        %1326 = vperm.xlu0 %1325, %v1188
        %v1327 = vpop.permute.xlu0 %1326
        %1330 = vset.pattern.permute.xlu0 0
        %1331 = vperm.xlu0 %1330, %v1189
        %v1332 = vpop.permute.xlu0 %1331
        %1335 = vset.pattern.permute.xlu0 0
        %1336 = vperm.xlu0 %1335, %v1190
        %v1337 = vpop.permute.xlu0 %1336
        %1340 = vset.pattern.permute.xlu0 0
        %1341 = vperm.xlu0 %1340, %v1191
        %v1342 = vpop.permute.xlu0 %1341
        %1345 = vset.pattern.permute.xlu0 0
        %1346 = vperm.xlu0 %1345, %v1192
        %v1347 = vpop.permute.xlu0 %1346
        %1350 = vset.pattern.permute.xlu0 0
        %1351 = vperm.xlu0 %1350, %v1193
        %v1352 = vpop.permute.xlu0 %1351
        %v1354 = vmul.f32 %v1098, %v1197
        %v1355 = vmul.f32 %v1099, %v1202
        %v1356 = vmul.f32 %v1100, %v1207
        %v1357 = vmul.f32 %v1101, %v1212
        %v1358 = vmul.f32 %v1102, %v1217
        %v1359 = vmul.f32 %v1103, %v1222
        %v1360 = vmul.f32 %v1104, %v1227
        %v1361 = vmul.f32 %v1105, %v1232
        %v1362 = vmul.f32 %v1106, %v1237
        %v1363 = vmul.f32 %v1107, %v1242
        %v1364 = vmul.f32 %v1108, %v1247
        %v1365 = vmul.f32 %v1109, %v1252
        %v1366 = vmul.f32 %v1110, %v1257
        %v1367 = vmul.f32 %v1111, %v1262
        %v1368 = vmul.f32 %v1112, %v1267
        %v1369 = vmul.f32 %v1113, %v1272
        %v1370 = vmul.f32 %v1114, %v1277
        %v1371 = vmul.f32 %v1115, %v1282
        %v1372 = vmul.f32 %v1116, %v1287
        %v1373 = vmul.f32 %v1117, %v1292
        %v1374 = vmul.f32 %v1118, %v1297
        %v1375 = vmul.f32 %v1119, %v1302
        %v1376 = vmul.f32 %v1120, %v1307
        %v1377 = vmul.f32 %v1121, %v1312
        %v1378 = vmul.f32 %v1122, %v1317
        %v1379 = vmul.f32 %v1123, %v1322
        %v1380 = vmul.f32 %v1124, %v1327
        %v1381 = vmul.f32 %v1125, %v1332
        %v1382 = vmul.f32 %v1126, %v1337
        %v1383 = vmul.f32 %v1127, %v1342
        %v1384 = vmul.f32 %v1128, %v1347
        %v1385 = vmul.f32 %v1129, %v1352
        %v1386 = vld [vmem:[%s1] sm:$0x1]
        %v1388 = vlaneseq
        %v1389 = vshrl.u32 %v1388, 7
        %v1390 = vsub.s32 0, %v1389
        %v1391 = vrot.slane %v1386, %v1390
        %v1393 = vmul.f32 %v1354, %v1391
        %v1394 = vmul.f32 %v1355, %v1391
        %v1395 = vmul.f32 %v1356, %v1391
        %v1396 = vmul.f32 %v1357, %v1391
        %v1397 = vmul.f32 %v1358, %v1391
        %v1398 = vmul.f32 %v1359, %v1391
        %v1399 = vmul.f32 %v1360, %v1391
        %v1400 = vmul.f32 %v1361, %v1391
        %v1401 = vmul.f32 %v1362, %v1391
        %v1402 = vmul.f32 %v1363, %v1391
        %v1403 = vmul.f32 %v1364, %v1391
        %v1404 = vmul.f32 %v1365, %v1391
        %v1405 = vmul.f32 %v1366, %v1391
        %v1406 = vmul.f32 %v1367, %v1391
        %v1407 = vmul.f32 %v1368, %v1391
        %v1408 = vmul.f32 %v1369, %v1391
        %v1409 = vmul.f32 %v1370, %v1391
        %v1410 = vmul.f32 %v1371, %v1391
        %v1411 = vmul.f32 %v1372, %v1391
        %v1412 = vmul.f32 %v1373, %v1391
        %v1413 = vmul.f32 %v1374, %v1391
        %v1414 = vmul.f32 %v1375, %v1391
        %v1415 = vmul.f32 %v1376, %v1391
        %v1416 = vmul.f32 %v1377, %v1391
        %v1417 = vmul.f32 %v1378, %v1391
        %v1418 = vmul.f32 %v1379, %v1391
        %v1419 = vmul.f32 %v1380, %v1391
        %v1420 = vmul.f32 %v1381, %v1391
        %v1421 = vmul.f32 %v1382, %v1391
        %v1422 = vmul.f32 %v1383, %v1391
        %v1423 = vmul.f32 %v1384, %v1391
        %v1424 = vmul.f32 %v1385, %v1391
        %v1425 = vld [vmem:[%s2] sm:$0x1]
        %v1427 = vlaneseq
        %v1428 = vshrl.u32 %v1427, 7
        %v1429 = vsub.s32 0, %v1428
        %v1430 = vrot.slane %v1425, %v1429
        %v1432 = vadd.f32 %v1393, %v1430
        %v1433 = vadd.f32 %v1394, %v1430
        %v1434 = vadd.f32 %v1395, %v1430
        %v1435 = vadd.f32 %v1396, %v1430
        %v1436 = vadd.f32 %v1397, %v1430
        %v1437 = vadd.f32 %v1398, %v1430
        %v1438 = vadd.f32 %v1399, %v1430
        %v1439 = vadd.f32 %v1400, %v1430
        %v1440 = vadd.f32 %v1401, %v1430
        %v1441 = vadd.f32 %v1402, %v1430
        %v1442 = vadd.f32 %v1403, %v1430
        %v1443 = vadd.f32 %v1404, %v1430
        %v1444 = vadd.f32 %v1405, %v1430
        %v1445 = vadd.f32 %v1406, %v1430
        %v1446 = vadd.f32 %v1407, %v1430
        %v1447 = vadd.f32 %v1408, %v1430
        %v1448 = vadd.f32 %v1409, %v1430
        %v1449 = vadd.f32 %v1410, %v1430
        %v1450 = vadd.f32 %v1411, %v1430
        %v1451 = vadd.f32 %v1412, %v1430
        %v1452 = vadd.f32 %v1413, %v1430
        %v1453 = vadd.f32 %v1414, %v1430
        %v1454 = vadd.f32 %v1415, %v1430
        %v1455 = vadd.f32 %v1416, %v1430
        %v1456 = vadd.f32 %v1417, %v1430
        %v1457 = vadd.f32 %v1418, %v1430
        %v1458 = vadd.f32 %v1419, %v1430
        %v1459 = vadd.f32 %v1420, %v1430
        %v1460 = vadd.f32 %v1421, %v1430
        %v1461 = vadd.f32 %v1422, %v1430
        %v1462 = vadd.f32 %v1423, %v1430
        %v1463 = vadd.f32 %v1424, %v1430
        %v1464 = vld [vmem:[#allocation6] sm:$0xff]
        %v1465 = vld [vmem:[#allocation6 + $0x8] sm:$0x1]
        %v1466 = vld [vmem:[%s4] sm:$0x1]
        %v1467 = vlaneseq
        %v1468 = vshrl.u32 %v1467, 7
        %v1469 = vadd.s32 %v1468, 8
        %v1470 = vrot.slane %v1432, 7
        %v1471 = vrot.slane %v1434, 7
        %v1472 = vrot.slane %v1436, 7
        %v1473 = vrot.slane %v1438, 7
        %v1474 = vrot.slane %v1440, 7
        %v1475 = vrot.slane %v1442, 7
        %v1476 = vrot.slane %v1444, 7
        %v1477 = vrot.slane %v1446, 7
        %v1478 = vrot.slane %v1448, 7
        %v1479 = vrot.slane %v1450, 7
        %v1480 = vrot.slane %v1452, 7
        %v1481 = vrot.slane %v1454, 7
        %v1482 = vrot.slane %v1456, 7
        %v1483 = vrot.slane %v1458, 7
        %v1484 = vrot.slane %v1460, 7
        %v1485 = vrot.slane %v1462, 7
        %v1486 = vrot.slane %v1433, 7
        %v1487 = vrot.slane %v1435, 7
        %v1488 = vrot.slane %v1437, 7
        %v1489 = vrot.slane %v1439, 7
        %v1490 = vrot.slane %v1441, 7
        %v1491 = vrot.slane %v1443, 7
        %v1492 = vrot.slane %v1445, 7
        %v1493 = vrot.slane %v1447, 7
        %v1494 = vrot.slane %v1449, 7
        %v1495 = vrot.slane %v1451, 7
        %v1496 = vrot.slane %v1453, 7
        %v1497 = vrot.slane %v1455, 7
        %v1498 = vrot.slane %v1457, 7
        %v1499 = vrot.slane %v1459, 7
        %v1500 = vrot.slane %v1461, 7
        %v1501 = vrot.slane %v1463, 7
        %vm1502 = vcmp.lt.s32.totalorder %v1468, 1
        %v1503 = vsel %vm1502, %v1470, %v1486
        %v1504 = vsel %vm1502, %v1471, %v1487
        %v1505 = vsel %vm1502, %v1472, %v1488
        %v1506 = vsel %vm1502, %v1473, %v1489
        %v1507 = vsel %vm1502, %v1474, %v1490
        %v1508 = vsel %vm1502, %v1475, %v1491
        %v1509 = vsel %vm1502, %v1476, %v1492
        %v1510 = vsel %vm1502, %v1477, %v1493
        %v1511 = vsel %vm1502, %v1478, %v1494
        %v1512 = vsel %vm1502, %v1479, %v1495
        %v1513 = vsel %vm1502, %v1480, %v1496
        %v1514 = vsel %vm1502, %v1481, %v1497
        %v1515 = vsel %vm1502, %v1482, %v1498
        %v1516 = vsel %vm1502, %v1483, %v1499
        %v1517 = vsel %vm1502, %v1484, %v1500
        %v1518 = vsel %vm1502, %v1485, %v1501
        %v1519 = vsel %vm1502, %v1486, %v1470
        %v1520 = vsel %vm1502, %v1487, %v1471
        %v1521 = vsel %vm1502, %v1488, %v1472
        %v1522 = vsel %vm1502, %v1489, %v1473
        %v1523 = vsel %vm1502, %v1490, %v1474
        %v1524 = vsel %vm1502, %v1491, %v1475
        %v1525 = vsel %vm1502, %v1492, %v1476
        %v1526 = vsel %vm1502, %v1493, %v1477
        %v1527 = vsel %vm1502, %v1494, %v1478
        %v1528 = vsel %vm1502, %v1495, %v1479
        %v1529 = vsel %vm1502, %v1496, %v1480
        %v1530 = vsel %vm1502, %v1497, %v1481
        %v1531 = vsel %vm1502, %v1498, %v1482
        %v1532 = vsel %vm1502, %v1499, %v1483
        %v1533 = vsel %vm1502, %v1500, %v1484
        %v1534 = vsel %vm1502, %v1501, %v1485
        %vm1535 = vcmp.ge.s32.totalorder %v1468, 1
        %vm1536 = vcmp.ge.s32.totalorder %v1469, 1
        %vm1537 = vcmp.lt.s32.totalorder %v1468, 17
        %vm1538 = vcmp.lt.s32.totalorder %v1469, 17
        %vm1539 = vmand %vm1535, %vm1537
        %vm1540 = vmand %vm1536, %vm1538
        %v1541 = vsel %vm1539, 1, 0
        %v1542 = vsel %vm1540, 1, 0
        %v1543 = vcvt.s32.f32 %v1541
        %v1544 = vcvt.s32.f32 %v1542
        %v1545 = vrot.slane %v1432, 1
        %v1546 = vrot.slane %v1434, 1
        %v1547 = vrot.slane %v1436, 1
        %v1548 = vrot.slane %v1438, 1
        %v1549 = vrot.slane %v1440, 1
        %v1550 = vrot.slane %v1442, 1
        %v1551 = vrot.slane %v1444, 1
        %v1552 = vrot.slane %v1446, 1
        %v1553 = vrot.slane %v1448, 1
        %v1554 = vrot.slane %v1450, 1
        %v1555 = vrot.slane %v1452, 1
        %v1556 = vrot.slane %v1454, 1
        %v1557 = vrot.slane %v1456, 1
        %v1558 = vrot.slane %v1458, 1
        %v1559 = vrot.slane %v1460, 1
        %v1560 = vrot.slane %v1462, 1
        %v1561 = vrot.slane %v1433, 1
        %v1562 = vrot.slane %v1435, 1
        %v1563 = vrot.slane %v1437, 1
        %v1564 = vrot.slane %v1439, 1
        %v1565 = vrot.slane %v1441, 1
        %v1566 = vrot.slane %v1443, 1
        %v1567 = vrot.slane %v1445, 1
        %v1568 = vrot.slane %v1447, 1
        %v1569 = vrot.slane %v1449, 1
        %v1570 = vrot.slane %v1451, 1
        %v1571 = vrot.slane %v1453, 1
        %v1572 = vrot.slane %v1455, 1
        %v1573 = vrot.slane %v1457, 1
        %v1574 = vrot.slane %v1459, 1
        %v1575 = vrot.slane %v1461, 1
        %v1576 = vrot.slane %v1463, 1
        %vm1577 = vcmp.lt.s32.totalorder %v1468, 7
        %v1578 = vsel %vm1577, %v1545, %v1561
        %v1579 = vsel %vm1577, %v1546, %v1562
        %v1580 = vsel %vm1577, %v1547, %v1563
        %v1581 = vsel %vm1577, %v1548, %v1564
        %v1582 = vsel %vm1577, %v1549, %v1565
        %v1583 = vsel %vm1577, %v1550, %v1566
        %v1584 = vsel %vm1577, %v1551, %v1567
        %v1585 = vsel %vm1577, %v1552, %v1568
        %v1586 = vsel %vm1577, %v1553, %v1569
        %v1587 = vsel %vm1577, %v1554, %v1570
        %v1588 = vsel %vm1577, %v1555, %v1571
        %v1589 = vsel %vm1577, %v1556, %v1572
        %v1590 = vsel %vm1577, %v1557, %v1573
        %v1591 = vsel %vm1577, %v1558, %v1574
        %v1592 = vsel %vm1577, %v1559, %v1575
        %v1593 = vsel %vm1577, %v1560, %v1576
        %v1594 = vsel %vm1577, %v1561, %v1545
        %v1595 = vsel %vm1577, %v1562, %v1546
        %v1596 = vsel %vm1577, %v1563, %v1547
        %v1597 = vsel %vm1577, %v1564, %v1548
        %v1598 = vsel %vm1577, %v1565, %v1549
        %v1599 = vsel %vm1577, %v1566, %v1550
        %v1600 = vsel %vm1577, %v1567, %v1551
        %v1601 = vsel %vm1577, %v1568, %v1552
        %v1602 = vsel %vm1577, %v1569, %v1553
        %v1603 = vsel %vm1577, %v1570, %v1554
        %v1604 = vsel %vm1577, %v1571, %v1555
        %v1605 = vsel %vm1577, %v1572, %v1556
        %v1606 = vsel %vm1577, %v1573, %v1557
        %v1607 = vsel %vm1577, %v1574, %v1558
        %v1608 = vsel %vm1577, %v1575, %v1559
        %v1609 = vsel %vm1577, %v1576, %v1560
        %vm1610 = vcmp.ge.s32.totalorder %v1468, 4294967295
        %vm1611 = vcmp.ge.s32.totalorder %v1469, 4294967295
        %vm1612 = vcmp.lt.s32.totalorder %v1468, 15
        %vm1613 = vcmp.lt.s32.totalorder %v1469, 15
        %vm1614 = vmand %vm1610, %vm1612
        %vm1615 = vmand %vm1611, %vm1613
        %v1616 = vsel %vm1614, 1, 0
        %v1617 = vsel %vm1615, 1, 0
        %v1618 = vcvt.s32.f32 %v1616
        %v1619 = vcvt.s32.f32 %v1617
        %v1620 = vlaneseq
        %v1621 = vshrl.u32 %v1620, 7
        %v1622 = vsub.s32 3, %v1621
        %v1623 = vrot.slane %v1464, %v1622
        %v1624 = vmul.f32 %v1623, %v1543
        %v1625 = vmul.f32 %v1623, %v1544
        %v1626 = vmul.f32 %v1519, %v1624
        %v1627 = vmul.f32 %v1503, %v1625
        %v1628 = vmul.f32 %v1520, %v1624
        %v1629 = vmul.f32 %v1504, %v1625
        %v1630 = vmul.f32 %v1521, %v1624
        %v1631 = vmul.f32 %v1505, %v1625
        %v1632 = vmul.f32 %v1522, %v1624
        %v1633 = vmul.f32 %v1506, %v1625
        %v1634 = vmul.f32 %v1523, %v1624
        %v1635 = vmul.f32 %v1507, %v1625
        %v1636 = vmul.f32 %v1524, %v1624
        %v1637 = vmul.f32 %v1508, %v1625
        %v1638 = vmul.f32 %v1525, %v1624
        %v1639 = vmul.f32 %v1509, %v1625
        %v1640 = vmul.f32 %v1526, %v1624
        %v1641 = vmul.f32 %v1510, %v1625
        %v1642 = vmul.f32 %v1527, %v1624
        %v1643 = vmul.f32 %v1511, %v1625
        %v1644 = vmul.f32 %v1528, %v1624
        %v1645 = vmul.f32 %v1512, %v1625
        %v1646 = vmul.f32 %v1529, %v1624
        %v1647 = vmul.f32 %v1513, %v1625
        %v1648 = vmul.f32 %v1530, %v1624
        %v1649 = vmul.f32 %v1514, %v1625
        %v1650 = vmul.f32 %v1531, %v1624
        %v1651 = vmul.f32 %v1515, %v1625
        %v1652 = vmul.f32 %v1532, %v1624
        %v1653 = vmul.f32 %v1516, %v1625
        %v1654 = vmul.f32 %v1533, %v1624
        %v1655 = vmul.f32 %v1517, %v1625
        %v1656 = vmul.f32 %v1534, %v1624
        %v1657 = vmul.f32 %v1518, %v1625
        %v1658 = vlaneseq
        %v1659 = vshrl.u32 %v1658, 7
        %v1660 = vsub.s32 4, %v1659
        %v1661 = vrot.slane %v1464, %v1660
        %v1662 = vmul.f32 %v1432, %v1661
        %v1663 = vmul.f32 %v1433, %v1661
        %v1664 = vmul.f32 %v1434, %v1661
        %v1665 = vmul.f32 %v1435, %v1661
        %v1666 = vmul.f32 %v1436, %v1661
        %v1667 = vmul.f32 %v1437, %v1661
        %v1668 = vmul.f32 %v1438, %v1661
        %v1669 = vmul.f32 %v1439, %v1661
        %v1670 = vmul.f32 %v1440, %v1661
        %v1671 = vmul.f32 %v1441, %v1661
        %v1672 = vmul.f32 %v1442, %v1661
        %v1673 = vmul.f32 %v1443, %v1661
        %v1674 = vmul.f32 %v1444, %v1661
        %v1675 = vmul.f32 %v1445, %v1661
        %v1676 = vmul.f32 %v1446, %v1661
        %v1677 = vmul.f32 %v1447, %v1661
        %v1678 = vmul.f32 %v1448, %v1661
        %v1679 = vmul.f32 %v1449, %v1661
        %v1680 = vmul.f32 %v1450, %v1661
        %v1681 = vmul.f32 %v1451, %v1661
        %v1682 = vmul.f32 %v1452, %v1661
        %v1683 = vmul.f32 %v1453, %v1661
        %v1684 = vmul.f32 %v1454, %v1661
        %v1685 = vmul.f32 %v1455, %v1661
        %v1686 = vmul.f32 %v1456, %v1661
        %v1687 = vmul.f32 %v1457, %v1661
        %v1688 = vmul.f32 %v1458, %v1661
        %v1689 = vmul.f32 %v1459, %v1661
        %v1690 = vmul.f32 %v1460, %v1661
        %v1691 = vmul.f32 %v1461, %v1661
        %v1692 = vmul.f32 %v1462, %v1661
        %v1693 = vmul.f32 %v1463, %v1661
        %v1694 = vadd.f32 %v1626, %v1662
        %v1695 = vadd.f32 %v1627, %v1663
        %v1696 = vadd.f32 %v1628, %v1664
        %v1697 = vadd.f32 %v1629, %v1665
        %v1698 = vadd.f32 %v1630, %v1666
        %v1699 = vadd.f32 %v1631, %v1667
        %v1700 = vadd.f32 %v1632, %v1668
        %v1701 = vadd.f32 %v1633, %v1669
        %v1702 = vadd.f32 %v1634, %v1670
        %v1703 = vadd.f32 %v1635, %v1671
        %v1704 = vadd.f32 %v1636, %v1672
        %v1705 = vadd.f32 %v1637, %v1673
        %v1706 = vadd.f32 %v1638, %v1674
        %v1707 = vadd.f32 %v1639, %v1675
        %v1708 = vadd.f32 %v1640, %v1676
        %v1709 = vadd.f32 %v1641, %v1677
        %v1710 = vadd.f32 %v1642, %v1678
        %v1711 = vadd.f32 %v1643, %v1679
        %v1712 = vadd.f32 %v1644, %v1680
        %v1713 = vadd.f32 %v1645, %v1681
        %v1714 = vadd.f32 %v1646, %v1682
        %v1715 = vadd.f32 %v1647, %v1683
        %v1716 = vadd.f32 %v1648, %v1684
        %v1717 = vadd.f32 %v1649, %v1685
        %v1718 = vadd.f32 %v1650, %v1686
        %v1719 = vadd.f32 %v1651, %v1687
        %v1720 = vadd.f32 %v1652, %v1688
        %v1721 = vadd.f32 %v1653, %v1689
        %v1722 = vadd.f32 %v1654, %v1690
        %v1723 = vadd.f32 %v1655, %v1691
        %v1724 = vadd.f32 %v1656, %v1692
        %v1725 = vadd.f32 %v1657, %v1693
        %v1726 = vlaneseq
        %v1727 = vshrl.u32 %v1726, 7
        %v1728 = vsub.s32 5, %v1727
        %v1729 = vrot.slane %v1464, %v1728
        %v1730 = vmul.f32 %v1729, %v1618
        %v1731 = vmul.f32 %v1729, %v1619
        %v1732 = vmul.f32 %v1578, %v1730
        %v1733 = vmul.f32 %v1594, %v1731
        %v1734 = vmul.f32 %v1579, %v1730
        %v1735 = vmul.f32 %v1595, %v1731
        %v1736 = vmul.f32 %v1580, %v1730
        %v1737 = vmul.f32 %v1596, %v1731
        %v1738 = vmul.f32 %v1581, %v1730
        %v1739 = vmul.f32 %v1597, %v1731
        %v1740 = vmul.f32 %v1582, %v1730
        %v1741 = vmul.f32 %v1598, %v1731
        %v1742 = vmul.f32 %v1583, %v1730
        %v1743 = vmul.f32 %v1599, %v1731
        %v1744 = vmul.f32 %v1584, %v1730
        %v1745 = vmul.f32 %v1600, %v1731
        %v1746 = vmul.f32 %v1585, %v1730
        %v1747 = vmul.f32 %v1601, %v1731
        %v1748 = vmul.f32 %v1586, %v1730
        %v1749 = vmul.f32 %v1602, %v1731
        %v1750 = vmul.f32 %v1587, %v1730
        %v1751 = vmul.f32 %v1603, %v1731
        %v1752 = vmul.f32 %v1588, %v1730
        %v1753 = vmul.f32 %v1604, %v1731
        %v1754 = vmul.f32 %v1589, %v1730
        %v1755 = vmul.f32 %v1605, %v1731
        %v1756 = vmul.f32 %v1590, %v1730
        %v1757 = vmul.f32 %v1606, %v1731
        %v1758 = vmul.f32 %v1591, %v1730
        %v1759 = vmul.f32 %v1607, %v1731
        %v1760 = vmul.f32 %v1592, %v1730
        %v1761 = vmul.f32 %v1608, %v1731
        %v1762 = vmul.f32 %v1593, %v1730
        %v1763 = vmul.f32 %v1609, %v1731
        %v1764 = vadd.f32 %v1694, %v1732
        %v1765 = vadd.f32 %v1695, %v1733
        %v1766 = vadd.f32 %v1696, %v1734
        %v1767 = vadd.f32 %v1697, %v1735
        %v1768 = vadd.f32 %v1698, %v1736
        %v1769 = vadd.f32 %v1699, %v1737
        %v1770 = vadd.f32 %v1700, %v1738
        %v1771 = vadd.f32 %v1701, %v1739
        %v1772 = vadd.f32 %v1702, %v1740
        %v1773 = vadd.f32 %v1703, %v1741
        %v1774 = vadd.f32 %v1704, %v1742
        %v1775 = vadd.f32 %v1705, %v1743
        %v1776 = vadd.f32 %v1706, %v1744
        %v1777 = vadd.f32 %v1707, %v1745
        %v1778 = vadd.f32 %v1708, %v1746
        %v1779 = vadd.f32 %v1709, %v1747
        %v1780 = vadd.f32 %v1710, %v1748
        %v1781 = vadd.f32 %v1711, %v1749
        %v1782 = vadd.f32 %v1712, %v1750
        %v1783 = vadd.f32 %v1713, %v1751
        %v1784 = vadd.f32 %v1714, %v1752
        %v1785 = vadd.f32 %v1715, %v1753
        %v1786 = vadd.f32 %v1716, %v1754
        %v1787 = vadd.f32 %v1717, %v1755
        %v1788 = vadd.f32 %v1718, %v1756
        %v1789 = vadd.f32 %v1719, %v1757
        %v1790 = vadd.f32 %v1720, %v1758
        %v1791 = vadd.f32 %v1721, %v1759
        %v1792 = vadd.f32 %v1722, %v1760
        %v1793 = vadd.f32 %v1723, %v1761
        %v1794 = vadd.f32 %v1724, %v1762
        %v1795 = vadd.f32 %v1725, %v1763
        %v1797 = vlaneseq
        %v1798 = vshrl.u32 %v1797, 7
        %v1799 = vsub.s32 0, %v1798
        %v1800 = vrot.slane %v1466, %v1799
        %v1802 = vadd.f32 %v1764, %v1800
        %v1803 = vadd.f32 %v1765, %v1800
        %v1804 = vadd.f32 %v1766, %v1800
        %v1805 = vadd.f32 %v1767, %v1800
        %v1806 = vadd.f32 %v1768, %v1800
        %v1807 = vadd.f32 %v1769, %v1800
        %v1808 = vadd.f32 %v1770, %v1800
        %v1809 = vadd.f32 %v1771, %v1800
        %v1810 = vadd.f32 %v1772, %v1800
        %v1811 = vadd.f32 %v1773, %v1800
        %v1812 = vadd.f32 %v1774, %v1800
        %v1813 = vadd.f32 %v1775, %v1800
        %v1814 = vadd.f32 %v1776, %v1800
        %v1815 = vadd.f32 %v1777, %v1800
        %v1816 = vadd.f32 %v1778, %v1800
        %v1817 = vadd.f32 %v1779, %v1800
        %v1818 = vadd.f32 %v1780, %v1800
        %v1819 = vadd.f32 %v1781, %v1800
        %v1820 = vadd.f32 %v1782, %v1800
        %v1821 = vadd.f32 %v1783, %v1800
        %v1822 = vadd.f32 %v1784, %v1800
        %v1823 = vadd.f32 %v1785, %v1800
        %v1824 = vadd.f32 %v1786, %v1800
        %v1825 = vadd.f32 %v1787, %v1800
        %v1826 = vadd.f32 %v1788, %v1800
        %v1827 = vadd.f32 %v1789, %v1800
        %v1828 = vadd.f32 %v1790, %v1800
        %v1829 = vadd.f32 %v1791, %v1800
        %v1830 = vadd.f32 %v1792, %v1800
        %v1831 = vadd.f32 %v1793, %v1800
        %v1832 = vadd.f32 %v1794, %v1800
        %v1833 = vadd.f32 %v1795, %v1800
        %1834 = vst [vmem:[#allocation2] sm:$0xff] %v1802
        %1835 = vst [vmem:[#allocation2 + $0x8] sm:$0xff] %v1803
        %1836 = vst [vmem:[#allocation2 + $0x10] sm:$0xff] %v1804
        %1837 = vst [vmem:[#allocation2 + $0x18] sm:$0xff] %v1805
        %1838 = vst [vmem:[#allocation2 + $0x20] sm:$0xff] %v1806
        %1839 = vst [vmem:[#allocation2 + $0x28] sm:$0xff] %v1807
        %1840 = vst [vmem:[#allocation2 + $0x30] sm:$0xff] %v1808
        %1841 = vst [vmem:[#allocation2 + $0x38] sm:$0xff] %v1809
        %1842 = vst [vmem:[#allocation2 + $0x40] sm:$0xff] %v1810
        %1843 = vst [vmem:[#allocation2 + $0x48] sm:$0xff] %v1811
        %1844 = vst [vmem:[#allocation2 + $0x50] sm:$0xff] %v1812
        %1845 = vst [vmem:[#allocation2 + $0x58] sm:$0xff] %v1813
        %1846 = vst [vmem:[#allocation2 + $0x60] sm:$0xff] %v1814
        %1847 = vst [vmem:[#allocation2 + $0x68] sm:$0xff] %v1815
        %1848 = vst [vmem:[#allocation2 + $0x70] sm:$0xff] %v1816
        %1849 = vst [vmem:[#allocation2 + $0x78] sm:$0xff] %v1817
        %1850 = vst [vmem:[#allocation2 + $0x80] sm:$0xff] %v1818
        %1851 = vst [vmem:[#allocation2 + $0x88] sm:$0xff] %v1819
        %1852 = vst [vmem:[#allocation2 + $0x90] sm:$0xff] %v1820
        %1853 = vst [vmem:[#allocation2 + $0x98] sm:$0xff] %v1821
        %1854 = vst [vmem:[#allocation2 + $0xa0] sm:$0xff] %v1822
        %1855 = vst [vmem:[#allocation2 + $0xa8] sm:$0xff] %v1823
        %1856 = vst [vmem:[#allocation2 + $0xb0] sm:$0xff] %v1824
        %1857 = vst [vmem:[#allocation2 + $0xb8] sm:$0xff] %v1825
        %1858 = vst [vmem:[#allocation2 + $0xc0] sm:$0xff] %v1826
        %1859 = vst [vmem:[#allocation2 + $0xc8] sm:$0xff] %v1827
        %1860 = vst [vmem:[#allocation2 + $0xd0] sm:$0xff] %v1828
        %1861 = vst [vmem:[#allocation2 + $0xd8] sm:$0xff] %v1829
        %1862 = vst [vmem:[#allocation2 + $0xe0] sm:$0xff] %v1830
        %1863 = vst [vmem:[#allocation2 + $0xe8] sm:$0xff] %v1831
        %1864 = vst [vmem:[#allocation2 + $0xf0] sm:$0xff] %v1832
        %1865 = vst [vmem:[#allocation2 + $0xf8] sm:$0xff] %v1833
        %v1866 = vlaneseq
        %v1867 = vshrl.u32 %v1866, 7
        %v1868 = vsub.s32 0, %v1867
        %v1869 = vrot.slane %v1464, %v1868
        %v1870 = vmul.f32 %v1869, %v1543
        %v1871 = vmul.f32 %v1869, %v1544
        %v1872 = vmul.f32 %v1519, %v1870
        %v1873 = vmul.f32 %v1503, %v1871
        %v1874 = vmul.f32 %v1520, %v1870
        %v1875 = vmul.f32 %v1504, %v1871
        %v1876 = vmul.f32 %v1521, %v1870
        %v1877 = vmul.f32 %v1505, %v1871
        %v1878 = vmul.f32 %v1522, %v1870
        %v1879 = vmul.f32 %v1506, %v1871
        %v1880 = vmul.f32 %v1523, %v1870
        %v1881 = vmul.f32 %v1507, %v1871
        %v1882 = vmul.f32 %v1524, %v1870
        %v1883 = vmul.f32 %v1508, %v1871
        %v1884 = vmul.f32 %v1525, %v1870
        %v1885 = vmul.f32 %v1509, %v1871
        %v1886 = vmul.f32 %v1526, %v1870
        %v1887 = vmul.f32 %v1510, %v1871
        %v1888 = vmul.f32 %v1527, %v1870
        %v1889 = vmul.f32 %v1511, %v1871
        %v1890 = vmul.f32 %v1528, %v1870
        %v1891 = vmul.f32 %v1512, %v1871
        %v1892 = vmul.f32 %v1529, %v1870
        %v1893 = vmul.f32 %v1513, %v1871
        %v1894 = vmul.f32 %v1530, %v1870
        %v1895 = vmul.f32 %v1514, %v1871
        %v1896 = vmul.f32 %v1531, %v1870
        %v1897 = vmul.f32 %v1515, %v1871
        %v1898 = vmul.f32 %v1532, %v1870
        %v1899 = vmul.f32 %v1516, %v1871
        %v1900 = vmul.f32 %v1533, %v1870
        %v1901 = vmul.f32 %v1517, %v1871
        %v1902 = vlaneseq
        %v1903 = vshrl.u32 %v1902, 7
        %v1904 = vsub.s32 1, %v1903
        %v1905 = vrot.slane %v1464, %v1904
        %v1906 = vmul.f32 %v1432, %v1905
        %v1907 = vmul.f32 %v1433, %v1905
        %v1908 = vmul.f32 %v1434, %v1905
        %v1909 = vmul.f32 %v1435, %v1905
        %v1910 = vmul.f32 %v1436, %v1905
        %v1911 = vmul.f32 %v1437, %v1905
        %v1912 = vmul.f32 %v1438, %v1905
        %v1913 = vmul.f32 %v1439, %v1905
        %v1914 = vmul.f32 %v1440, %v1905
        %v1915 = vmul.f32 %v1441, %v1905
        %v1916 = vmul.f32 %v1442, %v1905
        %v1917 = vmul.f32 %v1443, %v1905
        %v1918 = vmul.f32 %v1444, %v1905
        %v1919 = vmul.f32 %v1445, %v1905
        %v1920 = vmul.f32 %v1446, %v1905
        %v1921 = vmul.f32 %v1447, %v1905
        %v1922 = vmul.f32 %v1448, %v1905
        %v1923 = vmul.f32 %v1449, %v1905
        %v1924 = vmul.f32 %v1450, %v1905
        %v1925 = vmul.f32 %v1451, %v1905
        %v1926 = vmul.f32 %v1452, %v1905
        %v1927 = vmul.f32 %v1453, %v1905
        %v1928 = vmul.f32 %v1454, %v1905
        %v1929 = vmul.f32 %v1455, %v1905
        %v1930 = vmul.f32 %v1456, %v1905
        %v1931 = vmul.f32 %v1457, %v1905
        %v1932 = vmul.f32 %v1458, %v1905
        %v1933 = vmul.f32 %v1459, %v1905
        %v1934 = vmul.f32 %v1460, %v1905
        %v1935 = vmul.f32 %v1461, %v1905
        %v1936 = vadd.f32 %v1872, %v1906
        %v1937 = vadd.f32 %v1873, %v1907
        %v1938 = vadd.f32 %v1874, %v1908
        %v1939 = vadd.f32 %v1875, %v1909
        %v1940 = vadd.f32 %v1876, %v1910
        %v1941 = vadd.f32 %v1877, %v1911
        %v1942 = vadd.f32 %v1878, %v1912
        %v1943 = vadd.f32 %v1879, %v1913
        %v1944 = vadd.f32 %v1880, %v1914
        %v1945 = vadd.f32 %v1881, %v1915
        %v1946 = vadd.f32 %v1882, %v1916
        %v1947 = vadd.f32 %v1883, %v1917
        %v1948 = vadd.f32 %v1884, %v1918
        %v1949 = vadd.f32 %v1885, %v1919
        %v1950 = vadd.f32 %v1886, %v1920
        %v1951 = vadd.f32 %v1887, %v1921
        %v1952 = vadd.f32 %v1888, %v1922
        %v1953 = vadd.f32 %v1889, %v1923
        %v1954 = vadd.f32 %v1890, %v1924
        %v1955 = vadd.f32 %v1891, %v1925
        %v1956 = vadd.f32 %v1892, %v1926
        %v1957 = vadd.f32 %v1893, %v1927
        %v1958 = vadd.f32 %v1894, %v1928
        %v1959 = vadd.f32 %v1895, %v1929
        %v1960 = vadd.f32 %v1896, %v1930
        %v1961 = vadd.f32 %v1897, %v1931
        %v1962 = vadd.f32 %v1898, %v1932
        %v1963 = vadd.f32 %v1899, %v1933
        %v1964 = vadd.f32 %v1900, %v1934
        %v1965 = vadd.f32 %v1901, %v1935
        %v1966 = vlaneseq
        %v1967 = vshrl.u32 %v1966, 7
        %v1968 = vsub.s32 2, %v1967
        %v1969 = vrot.slane %v1464, %v1968
        %v1970 = vmul.f32 %v1969, %v1618
        %v1971 = vmul.f32 %v1969, %v1619
        %v1972 = vmul.f32 %v1578, %v1970
        %v1973 = vmul.f32 %v1594, %v1971
        %v1974 = vmul.f32 %v1579, %v1970
        %v1975 = vmul.f32 %v1595, %v1971
        %v1976 = vmul.f32 %v1580, %v1970
        %v1977 = vmul.f32 %v1596, %v1971
        %v1978 = vmul.f32 %v1581, %v1970
        %v1979 = vmul.f32 %v1597, %v1971
        %v1980 = vmul.f32 %v1582, %v1970
        %v1981 = vmul.f32 %v1598, %v1971
        %v1982 = vmul.f32 %v1583, %v1970
        %v1983 = vmul.f32 %v1599, %v1971
        %v1984 = vmul.f32 %v1584, %v1970
        %v1985 = vmul.f32 %v1600, %v1971
        %v1986 = vmul.f32 %v1585, %v1970
        %v1987 = vmul.f32 %v1601, %v1971
        %v1988 = vmul.f32 %v1586, %v1970
        %v1989 = vmul.f32 %v1602, %v1971
        %v1990 = vmul.f32 %v1587, %v1970
        %v1991 = vmul.f32 %v1603, %v1971
        %v1992 = vmul.f32 %v1588, %v1970
        %v1993 = vmul.f32 %v1604, %v1971
        %v1994 = vmul.f32 %v1589, %v1970
        %v1995 = vmul.f32 %v1605, %v1971
        %v1996 = vmul.f32 %v1590, %v1970
        %v1997 = vmul.f32 %v1606, %v1971
        %v1998 = vmul.f32 %v1591, %v1970
        %v1999 = vmul.f32 %v1607, %v1971
        %v2000 = vmul.f32 %v1592, %v1970
        %v2001 = vmul.f32 %v1608, %v1971
        %v2002 = vadd.f32 %v1936, %v1972
        %v2003 = vadd.f32 %v1937, %v1973
        %v2004 = vadd.f32 %v1938, %v1974
        %v2005 = vadd.f32 %v1939, %v1975
        %v2006 = vadd.f32 %v1940, %v1976
        %v2007 = vadd.f32 %v1941, %v1977
        %v2008 = vadd.f32 %v1942, %v1978
        %v2009 = vadd.f32 %v1943, %v1979
        %v2010 = vadd.f32 %v1944, %v1980
        %v2011 = vadd.f32 %v1945, %v1981
        %v2012 = vadd.f32 %v1946, %v1982
        %v2013 = vadd.f32 %v1947, %v1983
        %v2014 = vadd.f32 %v1948, %v1984
        %v2015 = vadd.f32 %v1949, %v1985
        %v2016 = vadd.f32 %v1950, %v1986
        %v2017 = vadd.f32 %v1951, %v1987
        %v2018 = vadd.f32 %v1952, %v1988
        %v2019 = vadd.f32 %v1953, %v1989
        %v2020 = vadd.f32 %v1954, %v1990
        %v2021 = vadd.f32 %v1955, %v1991
        %v2022 = vadd.f32 %v1956, %v1992
        %v2023 = vadd.f32 %v1957, %v1993
        %v2024 = vadd.f32 %v1958, %v1994
        %v2025 = vadd.f32 %v1959, %v1995
        %v2026 = vadd.f32 %v1960, %v1996
        %v2027 = vadd.f32 %v1961, %v1997
        %v2028 = vadd.f32 %v1962, %v1998
        %v2029 = vadd.f32 %v1963, %v1999
        %v2030 = vadd.f32 %v1964, %v2000
        %v2031 = vadd.f32 %v1965, %v2001
        %s2032 = scalar_lea.vmem [#allocation2], 16
        %v2033 = vld [vmem:[%s2032] sm:$0xff]
        %v2034 = vld [vmem:[%s2032 + $0x8] sm:$0xff]
        %v2035 = vld [vmem:[%s2032 + $0x10] sm:$0xff]
        %v2036 = vld [vmem:[%s2032 + $0x18] sm:$0xff]
        %v2037 = vld [vmem:[%s2032 + $0x20] sm:$0xff]
        %v2038 = vld [vmem:[%s2032 + $0x28] sm:$0xff]
        %v2039 = vld [vmem:[%s2032 + $0x30] sm:$0xff]
        %v2040 = vld [vmem:[%s2032 + $0x38] sm:$0xff]
        %v2041 = vld [vmem:[%s2032 + $0x40] sm:$0xff]
        %v2042 = vld [vmem:[%s2032 + $0x48] sm:$0xff]
        %v2043 = vld [vmem:[%s2032 + $0x50] sm:$0xff]
        %v2044 = vld [vmem:[%s2032 + $0x58] sm:$0xff]
        %v2045 = vld [vmem:[%s2032 + $0x60] sm:$0xff]
        %v2046 = vld [vmem:[%s2032 + $0x68] sm:$0xff]
        %v2047 = vld [vmem:[%s2032 + $0x70] sm:$0xff]
        %v2048 = vld [vmem:[%s2032 + $0x78] sm:$0xff]
        %v2049 = vld [vmem:[%s2032 + $0x80] sm:$0xff]
        %v2050 = vld [vmem:[%s2032 + $0x88] sm:$0xff]
        %v2051 = vld [vmem:[%s2032 + $0x90] sm:$0xff]
        %v2052 = vld [vmem:[%s2032 + $0x98] sm:$0xff]
        %v2053 = vld [vmem:[%s2032 + $0xa0] sm:$0xff]
        %v2054 = vld [vmem:[%s2032 + $0xa8] sm:$0xff]
        %v2055 = vld [vmem:[%s2032 + $0xb0] sm:$0xff]
        %v2056 = vld [vmem:[%s2032 + $0xb8] sm:$0xff]
        %v2057 = vld [vmem:[%s2032 + $0xc0] sm:$0xff]
        %v2058 = vld [vmem:[%s2032 + $0xc8] sm:$0xff]
        %v2059 = vld [vmem:[%s2032 + $0xd0] sm:$0xff]
        %v2060 = vld [vmem:[%s2032 + $0xd8] sm:$0xff]
        %v2061 = vld [vmem:[%s2032 + $0xe0] sm:$0xff]
        %v2062 = vld [vmem:[%s2032 + $0xe8] sm:$0xff]
        %v2063 = vadd.f32 %v2033, %v2002
        %v2064 = vadd.f32 %v2034, %v2003
        %v2065 = vadd.f32 %v2035, %v2004
        %v2066 = vadd.f32 %v2036, %v2005
        %v2067 = vadd.f32 %v2037, %v2006
        %v2068 = vadd.f32 %v2038, %v2007
        %v2069 = vadd.f32 %v2039, %v2008
        %v2070 = vadd.f32 %v2040, %v2009
        %v2071 = vadd.f32 %v2041, %v2010
        %v2072 = vadd.f32 %v2042, %v2011
        %v2073 = vadd.f32 %v2043, %v2012
        %v2074 = vadd.f32 %v2044, %v2013
        %v2075 = vadd.f32 %v2045, %v2014
        %v2076 = vadd.f32 %v2046, %v2015
        %v2077 = vadd.f32 %v2047, %v2016
        %v2078 = vadd.f32 %v2048, %v2017
        %v2079 = vadd.f32 %v2049, %v2018
        %v2080 = vadd.f32 %v2050, %v2019
        %v2081 = vadd.f32 %v2051, %v2020
        %v2082 = vadd.f32 %v2052, %v2021
        %v2083 = vadd.f32 %v2053, %v2022
        %v2084 = vadd.f32 %v2054, %v2023
        %v2085 = vadd.f32 %v2055, %v2024
        %v2086 = vadd.f32 %v2056, %v2025
        %v2087 = vadd.f32 %v2057, %v2026
        %v2088 = vadd.f32 %v2058, %v2027
        %v2089 = vadd.f32 %v2059, %v2028
        %v2090 = vadd.f32 %v2060, %v2029
        %v2091 = vadd.f32 %v2061, %v2030
        %v2092 = vadd.f32 %v2062, %v2031
        %2093 = vst [vmem:[%s2032] sm:$0xff] %v2063
        %2094 = vst [vmem:[%s2032 + $0x8] sm:$0xff] %v2064
        %2095 = vst [vmem:[%s2032 + $0x10] sm:$0xff] %v2065
        %2096 = vst [vmem:[%s2032 + $0x18] sm:$0xff] %v2066
        %2097 = vst [vmem:[%s2032 + $0x20] sm:$0xff] %v2067
        %2098 = vst [vmem:[%s2032 + $0x28] sm:$0xff] %v2068
        %2099 = vst [vmem:[%s2032 + $0x30] sm:$0xff] %v2069
        %2100 = vst [vmem:[%s2032 + $0x38] sm:$0xff] %v2070
        %2101 = vst [vmem:[%s2032 + $0x40] sm:$0xff] %v2071
        %2102 = vst [vmem:[%s2032 + $0x48] sm:$0xff] %v2072
        %2103 = vst [vmem:[%s2032 + $0x50] sm:$0xff] %v2073
        %2104 = vst [vmem:[%s2032 + $0x58] sm:$0xff] %v2074
        %2105 = vst [vmem:[%s2032 + $0x60] sm:$0xff] %v2075
        %2106 = vst [vmem:[%s2032 + $0x68] sm:$0xff] %v2076
        %2107 = vst [vmem:[%s2032 + $0x70] sm:$0xff] %v2077
        %2108 = vst [vmem:[%s2032 + $0x78] sm:$0xff] %v2078
        %2109 = vst [vmem:[%s2032 + $0x80] sm:$0xff] %v2079
        %2110 = vst [vmem:[%s2032 + $0x88] sm:$0xff] %v2080
        %2111 = vst [vmem:[%s2032 + $0x90] sm:$0xff] %v2081
        %2112 = vst [vmem:[%s2032 + $0x98] sm:$0xff] %v2082
        %2113 = vst [vmem:[%s2032 + $0xa0] sm:$0xff] %v2083
        %2114 = vst [vmem:[%s2032 + $0xa8] sm:$0xff] %v2084
        %2115 = vst [vmem:[%s2032 + $0xb0] sm:$0xff] %v2085
        %2116 = vst [vmem:[%s2032 + $0xb8] sm:$0xff] %v2086
        %2117 = vst [vmem:[%s2032 + $0xc0] sm:$0xff] %v2087
        %2118 = vst [vmem:[%s2032 + $0xc8] sm:$0xff] %v2088
        %2119 = vst [vmem:[%s2032 + $0xd0] sm:$0xff] %v2089
        %2120 = vst [vmem:[%s2032 + $0xd8] sm:$0xff] %v2090
        %2121 = vst [vmem:[%s2032 + $0xe0] sm:$0xff] %v2091
        %2122 = vst [vmem:[%s2032 + $0xe8] sm:$0xff] %v2092
        %v2123 = vlaneseq
        %v2124 = vshrl.u32 %v2123, 7
        %v2125 = vsub.s32 6, %v2124
        %v2126 = vrot.slane %v1464, %v2125
        %v2127 = vmul.f32 %v2126, %v1543
        %v2128 = vmul.f32 %v2126, %v1544
        %v2129 = vmul.f32 %v1520, %v2127
        %v2130 = vmul.f32 %v1504, %v2128
        %v2131 = vmul.f32 %v1521, %v2127
        %v2132 = vmul.f32 %v1505, %v2128
        %v2133 = vmul.f32 %v1522, %v2127
        %v2134 = vmul.f32 %v1506, %v2128
        %v2135 = vmul.f32 %v1523, %v2127
        %v2136 = vmul.f32 %v1507, %v2128
        %v2137 = vmul.f32 %v1524, %v2127
        %v2138 = vmul.f32 %v1508, %v2128
        %v2139 = vmul.f32 %v1525, %v2127
        %v2140 = vmul.f32 %v1509, %v2128
        %v2141 = vmul.f32 %v1526, %v2127
        %v2142 = vmul.f32 %v1510, %v2128
        %v2143 = vmul.f32 %v1527, %v2127
        %v2144 = vmul.f32 %v1511, %v2128
        %v2145 = vmul.f32 %v1528, %v2127
        %v2146 = vmul.f32 %v1512, %v2128
        %v2147 = vmul.f32 %v1529, %v2127
        %v2148 = vmul.f32 %v1513, %v2128
        %v2149 = vmul.f32 %v1530, %v2127
        %v2150 = vmul.f32 %v1514, %v2128
        %v2151 = vmul.f32 %v1531, %v2127
        %v2152 = vmul.f32 %v1515, %v2128
        %v2153 = vmul.f32 %v1532, %v2127
        %v2154 = vmul.f32 %v1516, %v2128
        %v2155 = vmul.f32 %v1533, %v2127
        %v2156 = vmul.f32 %v1517, %v2128
        %v2157 = vmul.f32 %v1534, %v2127
        %v2158 = vmul.f32 %v1518, %v2128
        %v2159 = vlaneseq
        %v2160 = vshrl.u32 %v2159, 7
        %v2161 = vsub.s32 7, %v2160
        %v2162 = vrot.slane %v1464, %v2161
        %v2163 = vmul.f32 %v1434, %v2162
        %v2164 = vmul.f32 %v1435, %v2162
        %v2165 = vmul.f32 %v1436, %v2162
        %v2166 = vmul.f32 %v1437, %v2162
        %v2167 = vmul.f32 %v1438, %v2162
        %v2168 = vmul.f32 %v1439, %v2162
        %v2169 = vmul.f32 %v1440, %v2162
        %v2170 = vmul.f32 %v1441, %v2162
        %v2171 = vmul.f32 %v1442, %v2162
        %v2172 = vmul.f32 %v1443, %v2162
        %v2173 = vmul.f32 %v1444, %v2162
        %v2174 = vmul.f32 %v1445, %v2162
        %v2175 = vmul.f32 %v1446, %v2162
        %v2176 = vmul.f32 %v1447, %v2162
        %v2177 = vmul.f32 %v1448, %v2162
        %v2178 = vmul.f32 %v1449, %v2162
        %v2179 = vmul.f32 %v1450, %v2162
        %v2180 = vmul.f32 %v1451, %v2162
        %v2181 = vmul.f32 %v1452, %v2162
        %v2182 = vmul.f32 %v1453, %v2162
        %v2183 = vmul.f32 %v1454, %v2162
        %v2184 = vmul.f32 %v1455, %v2162
        %v2185 = vmul.f32 %v1456, %v2162
        %v2186 = vmul.f32 %v1457, %v2162
        %v2187 = vmul.f32 %v1458, %v2162
        %v2188 = vmul.f32 %v1459, %v2162
        %v2189 = vmul.f32 %v1460, %v2162
        %v2190 = vmul.f32 %v1461, %v2162
        %v2191 = vmul.f32 %v1462, %v2162
        %v2192 = vmul.f32 %v1463, %v2162
        %v2193 = vadd.f32 %v2129, %v2163
        %v2194 = vadd.f32 %v2130, %v2164
        %v2195 = vadd.f32 %v2131, %v2165
        %v2196 = vadd.f32 %v2132, %v2166
        %v2197 = vadd.f32 %v2133, %v2167
        %v2198 = vadd.f32 %v2134, %v2168
        %v2199 = vadd.f32 %v2135, %v2169
        %v2200 = vadd.f32 %v2136, %v2170
        %v2201 = vadd.f32 %v2137, %v2171
        %v2202 = vadd.f32 %v2138, %v2172
        %v2203 = vadd.f32 %v2139, %v2173
        %v2204 = vadd.f32 %v2140, %v2174
        %v2205 = vadd.f32 %v2141, %v2175
        %v2206 = vadd.f32 %v2142, %v2176
        %v2207 = vadd.f32 %v2143, %v2177
        %v2208 = vadd.f32 %v2144, %v2178
        %v2209 = vadd.f32 %v2145, %v2179
        %v2210 = vadd.f32 %v2146, %v2180
        %v2211 = vadd.f32 %v2147, %v2181
        %v2212 = vadd.f32 %v2148, %v2182
        %v2213 = vadd.f32 %v2149, %v2183
        %v2214 = vadd.f32 %v2150, %v2184
        %v2215 = vadd.f32 %v2151, %v2185
        %v2216 = vadd.f32 %v2152, %v2186
        %v2217 = vadd.f32 %v2153, %v2187
        %v2218 = vadd.f32 %v2154, %v2188
        %v2219 = vadd.f32 %v2155, %v2189
        %v2220 = vadd.f32 %v2156, %v2190
        %v2221 = vadd.f32 %v2157, %v2191
        %v2222 = vadd.f32 %v2158, %v2192
        %v2223 = vlaneseq
        %v2224 = vshrl.u32 %v2223, 7
        %v2225 = vsub.s32 0, %v2224
        %v2226 = vrot.slane %v1465, %v2225
        %v2227 = vmul.f32 %v2226, %v1618
        %v2228 = vmul.f32 %v2226, %v1619
        %v2229 = vmul.f32 %v1579, %v2227
        %v2230 = vmul.f32 %v1595, %v2228
        %v2231 = vmul.f32 %v1580, %v2227
        %v2232 = vmul.f32 %v1596, %v2228
        %v2233 = vmul.f32 %v1581, %v2227
        %v2234 = vmul.f32 %v1597, %v2228
        %v2235 = vmul.f32 %v1582, %v2227
        %v2236 = vmul.f32 %v1598, %v2228
        %v2237 = vmul.f32 %v1583, %v2227
        %v2238 = vmul.f32 %v1599, %v2228
        %v2239 = vmul.f32 %v1584, %v2227
        %v2240 = vmul.f32 %v1600, %v2228
        %v2241 = vmul.f32 %v1585, %v2227
        %v2242 = vmul.f32 %v1601, %v2228
        %v2243 = vmul.f32 %v1586, %v2227
        %v2244 = vmul.f32 %v1602, %v2228
        %v2245 = vmul.f32 %v1587, %v2227
        %v2246 = vmul.f32 %v1603, %v2228
        %v2247 = vmul.f32 %v1588, %v2227
        %v2248 = vmul.f32 %v1604, %v2228
        %v2249 = vmul.f32 %v1589, %v2227
        %v2250 = vmul.f32 %v1605, %v2228
        %v2251 = vmul.f32 %v1590, %v2227
        %v2252 = vmul.f32 %v1606, %v2228
        %v2253 = vmul.f32 %v1591, %v2227
        %v2254 = vmul.f32 %v1607, %v2228
        %v2255 = vmul.f32 %v1592, %v2227
        %v2256 = vmul.f32 %v1608, %v2228
        %v2257 = vmul.f32 %v1593, %v2227
        %v2258 = vmul.f32 %v1609, %v2228
        %v2259 = vadd.f32 %v2193, %v2229
        %v2260 = vadd.f32 %v2194, %v2230
        %v2261 = vadd.f32 %v2195, %v2231
        %v2262 = vadd.f32 %v2196, %v2232
        %v2263 = vadd.f32 %v2197, %v2233
        %v2264 = vadd.f32 %v2198, %v2234
        %v2265 = vadd.f32 %v2199, %v2235
        %v2266 = vadd.f32 %v2200, %v2236
        %v2267 = vadd.f32 %v2201, %v2237
        %v2268 = vadd.f32 %v2202, %v2238
        %v2269 = vadd.f32 %v2203, %v2239
        %v2270 = vadd.f32 %v2204, %v2240
        %v2271 = vadd.f32 %v2205, %v2241
        %v2272 = vadd.f32 %v2206, %v2242
        %v2273 = vadd.f32 %v2207, %v2243
        %v2274 = vadd.f32 %v2208, %v2244
        %v2275 = vadd.f32 %v2209, %v2245
        %v2276 = vadd.f32 %v2210, %v2246
        %v2277 = vadd.f32 %v2211, %v2247
        %v2278 = vadd.f32 %v2212, %v2248
        %v2279 = vadd.f32 %v2213, %v2249
        %v2280 = vadd.f32 %v2214, %v2250
        %v2281 = vadd.f32 %v2215, %v2251
        %v2282 = vadd.f32 %v2216, %v2252
        %v2283 = vadd.f32 %v2217, %v2253
        %v2284 = vadd.f32 %v2218, %v2254
        %v2285 = vadd.f32 %v2219, %v2255
        %v2286 = vadd.f32 %v2220, %v2256
        %v2287 = vadd.f32 %v2221, %v2257
        %v2288 = vadd.f32 %v2222, %v2258
        %v2289 = vld [vmem:[#allocation2] sm:$0xff]
        %v2290 = vld [vmem:[#allocation2 + $0x8] sm:$0xff]
        %v2291 = vld [vmem:[#allocation2 + $0x10] sm:$0xff]
        %v2292 = vld [vmem:[#allocation2 + $0x18] sm:$0xff]
        %v2293 = vld [vmem:[#allocation2 + $0x20] sm:$0xff]
        %v2294 = vld [vmem:[#allocation2 + $0x28] sm:$0xff]
        %v2295 = vld [vmem:[#allocation2 + $0x30] sm:$0xff]
        %v2296 = vld [vmem:[#allocation2 + $0x38] sm:$0xff]
        %v2297 = vld [vmem:[#allocation2 + $0x40] sm:$0xff]
        %v2298 = vld [vmem:[#allocation2 + $0x48] sm:$0xff]
        %v2299 = vld [vmem:[#allocation2 + $0x50] sm:$0xff]
        %v2300 = vld [vmem:[#allocation2 + $0x58] sm:$0xff]
        %v2301 = vld [vmem:[#allocation2 + $0x60] sm:$0xff]
        %v2302 = vld [vmem:[#allocation2 + $0x68] sm:$0xff]
        %v2303 = vld [vmem:[#allocation2 + $0x70] sm:$0xff]
        %v2304 = vld [vmem:[#allocation2 + $0x78] sm:$0xff]
        %v2305 = vld [vmem:[#allocation2 + $0x80] sm:$0xff]
        %v2306 = vld [vmem:[#allocation2 + $0x88] sm:$0xff]
        %v2307 = vld [vmem:[#allocation2 + $0x90] sm:$0xff]
        %v2308 = vld [vmem:[#allocation2 + $0x98] sm:$0xff]
        %v2309 = vld [vmem:[#allocation2 + $0xa0] sm:$0xff]
        %v2310 = vld [vmem:[#allocation2 + $0xa8] sm:$0xff]
        %v2311 = vld [vmem:[#allocation2 + $0xb0] sm:$0xff]
        %v2312 = vld [vmem:[#allocation2 + $0xb8] sm:$0xff]
        %v2313 = vld [vmem:[#allocation2 + $0xc0] sm:$0xff]
        %v2314 = vld [vmem:[#allocation2 + $0xc8] sm:$0xff]
        %v2315 = vld [vmem:[#allocation2 + $0xd0] sm:$0xff]
        %v2316 = vld [vmem:[#allocation2 + $0xd8] sm:$0xff]
        %v2317 = vld [vmem:[#allocation2 + $0xe0] sm:$0xff]
        %v2318 = vld [vmem:[#allocation2 + $0xe8] sm:$0xff]
        %v2319 = vadd.f32 %v2289, %v2259
        %v2320 = vadd.f32 %v2290, %v2260
        %v2321 = vadd.f32 %v2291, %v2261
        %v2322 = vadd.f32 %v2292, %v2262
        %v2323 = vadd.f32 %v2293, %v2263
        %v2324 = vadd.f32 %v2294, %v2264
        %v2325 = vadd.f32 %v2295, %v2265
        %v2326 = vadd.f32 %v2296, %v2266
        %v2327 = vadd.f32 %v2297, %v2267
        %v2328 = vadd.f32 %v2298, %v2268
        %v2329 = vadd.f32 %v2299, %v2269
        %v2330 = vadd.f32 %v2300, %v2270
        %v2331 = vadd.f32 %v2301, %v2271
        %v2332 = vadd.f32 %v2302, %v2272
        %v2333 = vadd.f32 %v2303, %v2273
        %v2334 = vadd.f32 %v2304, %v2274
        %v2335 = vadd.f32 %v2305, %v2275
        %v2336 = vadd.f32 %v2306, %v2276
        %v2337 = vadd.f32 %v2307, %v2277
        %v2338 = vadd.f32 %v2308, %v2278
        %v2339 = vadd.f32 %v2309, %v2279
        %v2340 = vadd.f32 %v2310, %v2280
        %v2341 = vadd.f32 %v2311, %v2281
        %v2342 = vadd.f32 %v2312, %v2282
        %v2343 = vadd.f32 %v2313, %v2283
        %v2344 = vadd.f32 %v2314, %v2284
        %v2345 = vadd.f32 %v2315, %v2285
        %v2346 = vadd.f32 %v2316, %v2286
        %v2347 = vadd.f32 %v2317, %v2287
        %v2348 = vadd.f32 %v2318, %v2288
        %2349 = vst [vmem:[#allocation2] sm:$0xff] %v2319
        %2350 = vst [vmem:[#allocation2 + $0x8] sm:$0xff] %v2320
        %2351 = vst [vmem:[#allocation2 + $0x10] sm:$0xff] %v2321
        %2352 = vst [vmem:[#allocation2 + $0x18] sm:$0xff] %v2322
        %2353 = vst [vmem:[#allocation2 + $0x20] sm:$0xff] %v2323
        %2354 = vst [vmem:[#allocation2 + $0x28] sm:$0xff] %v2324
        %2355 = vst [vmem:[#allocation2 + $0x30] sm:$0xff] %v2325
        %2356 = vst [vmem:[#allocation2 + $0x38] sm:$0xff] %v2326
        %2357 = vst [vmem:[#allocation2 + $0x40] sm:$0xff] %v2327
        %2358 = vst [vmem:[#allocation2 + $0x48] sm:$0xff] %v2328
        %2359 = vst [vmem:[#allocation2 + $0x50] sm:$0xff] %v2329
        %2360 = vst [vmem:[#allocation2 + $0x58] sm:$0xff] %v2330
        %2361 = vst [vmem:[#allocation2 + $0x60] sm:$0xff] %v2331
        %2362 = vst [vmem:[#allocation2 + $0x68] sm:$0xff] %v2332
        %2363 = vst [vmem:[#allocation2 + $0x70] sm:$0xff] %v2333
        %2364 = vst [vmem:[#allocation2 + $0x78] sm:$0xff] %v2334
        %2365 = vst [vmem:[#allocation2 + $0x80] sm:$0xff] %v2335
        %2366 = vst [vmem:[#allocation2 + $0x88] sm:$0xff] %v2336
        %2367 = vst [vmem:[#allocation2 + $0x90] sm:$0xff] %v2337
        %2368 = vst [vmem:[#allocation2 + $0x98] sm:$0xff] %v2338
        %2369 = vst [vmem:[#allocation2 + $0xa0] sm:$0xff] %v2339
        %2370 = vst [vmem:[#allocation2 + $0xa8] sm:$0xff] %v2340
        %2371 = vst [vmem:[#allocation2 + $0xb0] sm:$0xff] %v2341
        %2372 = vst [vmem:[#allocation2 + $0xb8] sm:$0xff] %v2342
        %2373 = vst [vmem:[#allocation2 + $0xc0] sm:$0xff] %v2343
        %2374 = vst [vmem:[#allocation2 + $0xc8] sm:$0xff] %v2344
        %2375 = vst [vmem:[#allocation2 + $0xd0] sm:$0xff] %v2345
        %2376 = vst [vmem:[#allocation2 + $0xd8] sm:$0xff] %v2346
        %2377 = vst [vmem:[#allocation2 + $0xe0] sm:$0xff] %v2347
        %2378 = vst [vmem:[#allocation2 + $0xe8] sm:$0xff] %v2348
        %v2379 = vld [vmem:[#allocation2] sm:$0xff]
        %v2380 = vld [vmem:[#allocation2 + $0x8] sm:$0xff]
        %v2381 = vld [vmem:[#allocation2 + $0x10] sm:$0xff]
        %v2382 = vld [vmem:[#allocation2 + $0x18] sm:$0xff]
        %v2383 = vld [vmem:[#allocation2 + $0x20] sm:$0xff]
        %v2384 = vld [vmem:[#allocation2 + $0x28] sm:$0xff]
        %v2385 = vld [vmem:[#allocation2 + $0x30] sm:$0xff]
        %v2386 = vld [vmem:[#allocation2 + $0x38] sm:$0xff]
        %v2387 = vld [vmem:[#allocation2 + $0x40] sm:$0xff]
        %v2388 = vld [vmem:[#allocation2 + $0x48] sm:$0xff]
        %v2389 = vld [vmem:[#allocation2 + $0x50] sm:$0xff]
        %v2390 = vld [vmem:[#allocation2 + $0x58] sm:$0xff]
        %v2391 = vld [vmem:[#allocation2 + $0x60] sm:$0xff]
        %v2392 = vld [vmem:[#allocation2 + $0x68] sm:$0xff]
        %v2393 = vld [vmem:[#allocation2 + $0x70] sm:$0xff]
        %v2394 = vld [vmem:[#allocation2 + $0x78] sm:$0xff]
        %v2395 = vld [vmem:[#allocation2 + $0x80] sm:$0xff]
        %v2396 = vld [vmem:[#allocation2 + $0x88] sm:$0xff]
        %v2397 = vld [vmem:[#allocation2 + $0x90] sm:$0xff]
        %v2398 = vld [vmem:[#allocation2 + $0x98] sm:$0xff]
        %v2399 = vld [vmem:[#allocation2 + $0xa0] sm:$0xff]
        %v2400 = vld [vmem:[#allocation2 + $0xa8] sm:$0xff]
        %v2401 = vld [vmem:[#allocation2 + $0xb0] sm:$0xff]
        %v2402 = vld [vmem:[#allocation2 + $0xb8] sm:$0xff]
        %v2403 = vld [vmem:[#allocation2 + $0xc0] sm:$0xff]
        %v2404 = vld [vmem:[#allocation2 + $0xc8] sm:$0xff]
        %v2405 = vld [vmem:[#allocation2 + $0xd0] sm:$0xff]
        %v2406 = vld [vmem:[#allocation2 + $0xd8] sm:$0xff]
        %v2407 = vld [vmem:[#allocation2 + $0xe0] sm:$0xff]
        %v2408 = vld [vmem:[#allocation2 + $0xe8] sm:$0xff]
        %v2409 = vld [vmem:[#allocation2 + $0xf0] sm:$0xff]
        %v2410 = vld [vmem:[#allocation2 + $0xf8] sm:$0xff]
        %2411 = vst [vmem:[%s288] sm:$0xff] %v2379
        %2412 = vst [vmem:[%s288 + $0x8] sm:$0xff] %v2380
        %2413 = vst [vmem:[%s288 + $0x10] sm:$0xff] %v2381
        %2414 = vst [vmem:[%s288 + $0x18] sm:$0xff] %v2382
        %2415 = vst [vmem:[%s288 + $0x20] sm:$0xff] %v2383
        %2416 = vst [vmem:[%s288 + $0x28] sm:$0xff] %v2384
        %2417 = vst [vmem:[%s288 + $0x30] sm:$0xff] %v2385
        %2418 = vst [vmem:[%s288 + $0x38] sm:$0xff] %v2386
        %2419 = vst [vmem:[%s288 + $0x40] sm:$0xff] %v2387
        %2420 = vst [vmem:[%s288 + $0x48] sm:$0xff] %v2388
        %2421 = vst [vmem:[%s288 + $0x50] sm:$0xff] %v2389
        %2422 = vst [vmem:[%s288 + $0x58] sm:$0xff] %v2390
        %2423 = vst [vmem:[%s288 + $0x60] sm:$0xff] %v2391
        %2424 = vst [vmem:[%s288 + $0x68] sm:$0xff] %v2392
        %2425 = vst [vmem:[%s288 + $0x70] sm:$0xff] %v2393
        %2426 = vst [vmem:[%s288 + $0x78] sm:$0xff] %v2394
        %2427 = vst [vmem:[%s288 + $0x80] sm:$0xff] %v2395
        %2428 = vst [vmem:[%s288 + $0x88] sm:$0xff] %v2396
        %2429 = vst [vmem:[%s288 + $0x90] sm:$0xff] %v2397
        %2430 = vst [vmem:[%s288 + $0x98] sm:$0xff] %v2398
        %2431 = vst [vmem:[%s288 + $0xa0] sm:$0xff] %v2399
        %2432 = vst [vmem:[%s288 + $0xa8] sm:$0xff] %v2400
        %2433 = vst [vmem:[%s288 + $0xb0] sm:$0xff] %v2401
        %2434 = vst [vmem:[%s288 + $0xb8] sm:$0xff] %v2402
        %2435 = vst [vmem:[%s288 + $0xc0] sm:$0xff] %v2403
        %2436 = vst [vmem:[%s288 + $0xc8] sm:$0xff] %v2404
        %2437 = vst [vmem:[%s288 + $0xd0] sm:$0xff] %v2405
        %2438 = vst [vmem:[%s288 + $0xd8] sm:$0xff] %v2406
        %2439 = vst [vmem:[%s288 + $0xe0] sm:$0xff] %v2407
        %2440 = vst [vmem:[%s288 + $0xe8] sm:$0xff] %v2408
        %2441 = vst [vmem:[%s288 + $0xf0] sm:$0xff] %v2409
        %2442 = vst [vmem:[%s288 + $0xf8] sm:$0xff] %v2410
        %2443 = vmatprep.subr.mxu0 0.0
        %2444 = vmatpush1.msra.mxu0 %v2394
        %2445 = vmatprep.subr.mxu0 0.0
        %2446 = vmatpush1.msra.mxu0 %v2393
        %2447 = vmatprep.subr.mxu0 0.0
        %2448 = vmatpush1.msra.mxu0 %v2392
        %2449 = vmatprep.subr.mxu0 0.0
        %2450 = vmatpush1.msra.mxu0 %v2391
        %2451 = vmatprep.subr.mxu0 0.0
        %2452 = vmatpush1.msra.mxu0 %v2390
        %2453 = vmatprep.subr.mxu0 0.0
        %2454 = vmatpush1.msra.mxu0 %v2389
        %2455 = vmatprep.subr.mxu0 0.0
        %2456 = vmatpush1.msra.mxu0 %v2388
        %2457 = vmatprep.subr.mxu0 0.0
        %2458 = vmatpush1.msra.mxu0 %v2387
        %2459 = vmatprep.subr.mxu0 0.0
        %2460 = vmatpush1.msra.mxu0 %v2386
        %2461 = vmatprep.subr.mxu0 0.0
        %2462 = vmatpush1.msra.mxu0 %v2385
        %2463 = vmatprep.subr.mxu0 0.0
        %2464 = vmatpush1.msra.mxu0 %v2384
        %2465 = vmatprep.subr.mxu0 0.0
        %2466 = vmatpush1.msra.mxu0 %v2383
        %2467 = vmatprep.subr.mxu0 0.0
        %2468 = vmatpush1.msra.mxu0 %v2382
        %2469 = vmatprep.subr.mxu0 0.0
        %2470 = vmatpush1.msra.mxu0 %v2381
        %2471 = vmatprep.subr.mxu0 0.0
        %2472 = vmatpush1.msra.mxu0 %v2380
        %2473 = vmatprep.subr.mxu0 0.0
        %2474 = vmatpush1.msra.mxu0 %v2379
        %2475 = vmatprep.subr.mxu0 0.0
        %2476 = vmatpush2.msra.mxu0 %v2410
        %2477 = vmatprep.subr.mxu0 0.0
        %2478 = vmatpush2.msra.mxu0 %v2409
        %2479 = vmatprep.subr.mxu0 0.0
        %2480 = vmatpush2.msra.mxu0 %v2408
        %2481 = vmatprep.subr.mxu0 0.0
        %2482 = vmatpush2.msra.mxu0 %v2407
        %2483 = vmatprep.subr.mxu0 0.0
        %2484 = vmatpush2.msra.mxu0 %v2406
        %2485 = vmatprep.subr.mxu0 0.0
        %2486 = vmatpush2.msra.mxu0 %v2405
        %2487 = vmatprep.subr.mxu0 0.0
        %2488 = vmatpush2.msra.mxu0 %v2404
        %2489 = vmatprep.subr.mxu0 0.0
        %2490 = vmatpush2.msra.mxu0 %v2403
        %2491 = vmatprep.subr.mxu0 0.0
        %2492 = vmatpush2.msra.mxu0 %v2402
        %2493 = vmatprep.subr.mxu0 0.0
        %2494 = vmatpush2.msra.mxu0 %v2401
        %2495 = vmatprep.subr.mxu0 0.0
        %2496 = vmatpush2.msra.mxu0 %v2400
        %2497 = vmatprep.subr.mxu0 0.0
        %2498 = vmatpush2.msra.mxu0 %v2399
        %2499 = vmatprep.subr.mxu0 0.0
        %2500 = vmatpush2.msra.mxu0 %v2398
        %2501 = vmatprep.subr.mxu0 0.0
        %2502 = vmatpush2.msra.mxu0 %v2397
        %2503 = vmatprep.subr.mxu0 0.0
        %2504 = vmatpush2.msra.mxu0 %v2396
        %2505 = vmatprep.subr.mxu0 0.0
        %2506 = vmatpush2.msra.mxu0 %v2395
        %2507 = vmatprep.mubr.f32.mxu0 1.0
        %2508 = vmatmul.mubr.f32.gmra.mxu0 1.0
        %v2509 = vpop.f32.mrf.mxu0
        %v2510 = vadd.f32 0.0, %v2509
        %v2511 = vpop.f32.mrf.mxu0
        %2512 = vdwg.mxu0
        %v2513 = vmul.f32 %v2379, %v2379
        %v2514 = vmul.f32 %v2380, %v2380
        %v2515 = vmul.f32 %v2381, %v2381
        %v2516 = vmul.f32 %v2382, %v2382
        %v2517 = vmul.f32 %v2383, %v2383
        %v2518 = vmul.f32 %v2384, %v2384
        %v2519 = vmul.f32 %v2385, %v2385
        %v2520 = vmul.f32 %v2386, %v2386
        %v2521 = vmul.f32 %v2387, %v2387
        %v2522 = vmul.f32 %v2388, %v2388
        %v2523 = vmul.f32 %v2389, %v2389
        %v2524 = vmul.f32 %v2390, %v2390
        %v2525 = vmul.f32 %v2391, %v2391
        %v2526 = vmul.f32 %v2392, %v2392
        %v2527 = vmul.f32 %v2393, %v2393
        %v2528 = vmul.f32 %v2394, %v2394
        %v2529 = vmul.f32 %v2395, %v2395
        %v2530 = vmul.f32 %v2396, %v2396
        %v2531 = vmul.f32 %v2397, %v2397
        %v2532 = vmul.f32 %v2398, %v2398
        %v2533 = vmul.f32 %v2399, %v2399
        %v2534 = vmul.f32 %v2400, %v2400
        %v2535 = vmul.f32 %v2401, %v2401
        %v2536 = vmul.f32 %v2402, %v2402
        %v2537 = vmul.f32 %v2403, %v2403
        %v2538 = vmul.f32 %v2404, %v2404
        %v2539 = vmul.f32 %v2405, %v2405
        %v2540 = vmul.f32 %v2406, %v2406
        %v2541 = vmul.f32 %v2407, %v2407
        %v2542 = vmul.f32 %v2408, %v2408
        %v2543 = vmul.f32 %v2409, %v2409
        %v2544 = vmul.f32 %v2410, %v2410
        %2545 = vmatprep.subr.mxu0 0.0
        %2546 = vmatpush1.msra.mxu0 %v2528
        %2547 = vmatprep.subr.mxu0 0.0
        %2548 = vmatpush1.msra.mxu0 %v2527
        %2549 = vmatprep.subr.mxu0 0.0
        %2550 = vmatpush1.msra.mxu0 %v2526
        %2551 = vmatprep.subr.mxu0 0.0
        %2552 = vmatpush1.msra.mxu0 %v2525
        %2553 = vmatprep.subr.mxu0 0.0
        %2554 = vmatpush1.msra.mxu0 %v2524
        %2555 = vmatprep.subr.mxu0 0.0
        %2556 = vmatpush1.msra.mxu0 %v2523
        %2557 = vmatprep.subr.mxu0 0.0
        %2558 = vmatpush1.msra.mxu0 %v2522
        %2559 = vmatprep.subr.mxu0 0.0
        %2560 = vmatpush1.msra.mxu0 %v2521
        %2561 = vmatprep.subr.mxu0 0.0
        %2562 = vmatpush1.msra.mxu0 %v2520
        %2563 = vmatprep.subr.mxu0 0.0
        %2564 = vmatpush1.msra.mxu0 %v2519
        %2565 = vmatprep.subr.mxu0 0.0
        %2566 = vmatpush1.msra.mxu0 %v2518
        %2567 = vmatprep.subr.mxu0 0.0
        %2568 = vmatpush1.msra.mxu0 %v2517
        %2569 = vmatprep.subr.mxu0 0.0
        %2570 = vmatpush1.msra.mxu0 %v2516
        %2571 = vmatprep.subr.mxu0 0.0
        %2572 = vmatpush1.msra.mxu0 %v2515
        %2573 = vmatprep.subr.mxu0 0.0
        %2574 = vmatpush1.msra.mxu0 %v2514
        %2575 = vmatprep.subr.mxu0 0.0
        %2576 = vmatpush1.msra.mxu0 %v2513
        %2577 = vmatprep.subr.mxu0 0.0
        %2578 = vmatpush2.msra.mxu0 %v2544
        %2579 = vmatprep.subr.mxu0 0.0
        %2580 = vmatpush2.msra.mxu0 %v2543
        %2581 = vmatprep.subr.mxu0 0.0
        %2582 = vmatpush2.msra.mxu0 %v2542
        %2583 = vmatprep.subr.mxu0 0.0
        %2584 = vmatpush2.msra.mxu0 %v2541
        %2585 = vmatprep.subr.mxu0 0.0
        %2586 = vmatpush2.msra.mxu0 %v2540
        %2587 = vmatprep.subr.mxu0 0.0
        %2588 = vmatpush2.msra.mxu0 %v2539
        %2589 = vmatprep.subr.mxu0 0.0
        %2590 = vmatpush2.msra.mxu0 %v2538
        %2591 = vmatprep.subr.mxu0 0.0
        %2592 = vmatpush2.msra.mxu0 %v2537
        %2593 = vmatprep.subr.mxu0 0.0
        %2594 = vmatpush2.msra.mxu0 %v2536
        %2595 = vmatprep.subr.mxu0 0.0
        %2596 = vmatpush2.msra.mxu0 %v2535
        %2597 = vmatprep.subr.mxu0 0.0
        %2598 = vmatpush2.msra.mxu0 %v2534
        %2599 = vmatprep.subr.mxu0 0.0
        %2600 = vmatpush2.msra.mxu0 %v2533
        %2601 = vmatprep.subr.mxu0 0.0
        %2602 = vmatpush2.msra.mxu0 %v2532
        %2603 = vmatprep.subr.mxu0 0.0
        %2604 = vmatpush2.msra.mxu0 %v2531
        %2605 = vmatprep.subr.mxu0 0.0
        %2606 = vmatpush2.msra.mxu0 %v2530
        %2607 = vmatprep.subr.mxu0 0.0
        %2608 = vmatpush2.msra.mxu0 %v2529
        %2609 = vmatprep.mubr.f32.mxu0 1.0
        %2610 = vmatmul.mubr.f32.gmra.mxu0 1.0
        %v2611 = vpop.f32.mrf.mxu0
        %v2612 = vadd.f32 0.0, %v2611
        %v2613 = vpop.f32.mrf.mxu0
        %2614 = vdwg.mxu0
        %v2616 = vrot.slane %v2612, 7
        %vm2618 = vcmask 1040384
        %v2619 = vsel %vm2618, %v2510, %v2616
        %2620 = vst [vmem:[%s295] sm:$0x3] %v2619
        %s2621 = sand.u32 %s146, 1
        %s2622 = scalar_lea.sflag [#allocation5], %s2621
        %s2623 = sand.u32 %s146, 1
        %s2624 = smul.addr %s2623, 256
        %s2625 = scalar_lea.vmem [#allocation8], %s2624
        %s2626 = sand.u32 %s172, 1
        %s2627 = scalar_lea.sflag [#allocation10], %s2626
        %s2628 = sand.u32 %s172, 1
        %s2629 = smul.addr %s2628, 2
        %s2630 = scalar_lea.vmem [#allocation9], %s2629
        // Predicated region
        $region49: #{tpu_custom_call.1} parent=39 // pred_check
          %p2631 = pneg %p156
        $region50: #{tpu_custom_call.1} parent=39 // pred_check_branch
          %2633 = sbr.rel (%p2631) target = $region52
        $region51: #{tpu_custom_call.1} parent=39 // pred_region
          %s2635 = ssub.s32 4096, 4096
          %2636 = vsyncadd %s2622, %s2635
          %s2637 = smul.addr %s28, 32
          %s2638 = smul.addr %s2637, 128
          %s2639 = scalar_lea.hbm %s5, %s2638
          %s2640 = sshll.u32 %s2625, 4
          %s2641 = int_to_ptr.vmem [resolvable:$true] %s2640
          %2646 = dma.vmem_to_hbm [thread:$0]  %s2641, 4096, %s2639, %s2622, 128, 128, 8
        $region52: #{tpu_custom_call.1} parent=39 // pred_fallthru
          _
        // Predicated region
        $region53: #{tpu_custom_call.1} parent=39 // pred_check
          %p2647 = pneg %p182
        $region54: #{tpu_custom_call.1} parent=39 // pred_check_branch
          %2649 = sbr.rel (%p2647) target = $region56
        $region55: #{tpu_custom_call.1} parent=39 // pred_region
          %s2651 = ssub.s32 32, 32
          %2652 = vsyncadd %s2627, %s2651
          %s2653 = smul.addr %s28, 32
          %s2654 = scalar_lea.hbm %s6, %s2653
          %s2656 = sshll.u32 %s2630, 4
          %s2657 = int_to_ptr.vmem [resolvable:$true] %s2656
          %2659 = dma.vmem_to_hbm [thread:$0]  %s2657, 32, %s2654, %s2627
        $region56: #{tpu_custom_call.1} parent=39 // pred_fallthru
          _
      $region40: #{tpu_custom_call.1} parent=5 // pred_fallthru
        _
      %p2660 = scmp.le.s32.totalorder 2, %s23
      // Predicated region
      $region57: #{tpu_custom_call.1} parent=5 // pred_check
        %p2661 = pneg %p2660
      $region58: #{tpu_custom_call.1} parent=5 // pred_check_branch
        %2663 = sbr.rel (%p2661) target = $region60
      $region59: #{tpu_custom_call.1} parent=5 // pred_region
        %s2664 = ssub.s32 %s23, 2
        // Predicated region
        $region61: #{tpu_custom_call.1} parent=59 // pred_check
          %p2665 = pneg %p162
        $region62: #{tpu_custom_call.1} parent=59 // pred_check_branch
          %2667 = sbr.rel (%p2665) target = $region64
        $region63: #{tpu_custom_call.1} parent=59 // pred_region
          %s2668 = sand.u32 %s147, 1
          %s2669 = scalar_lea.sflag [#allocation5], %s2668
          %s2670 = sand.u32 %s147, 1
          %s2671 = smul.addr %s2670, 256
          %s2672 = scalar_lea.vmem [#allocation8], %s2671
          %2673 = dma.done %s2669, 4096
        $region64: #{tpu_custom_call.1} parent=59 // pred_fallthru
          _
        // Predicated region
        $region65: #{tpu_custom_call.1} parent=59 // pred_check
          %p2674 = pneg %p188
        $region66: #{tpu_custom_call.1} parent=59 // pred_check_branch
          %2676 = sbr.rel (%p2674) target = $region68
        $region67: #{tpu_custom_call.1} parent=59 // pred_region
          %s2677 = sand.u32 %s173, 1
          %s2678 = scalar_lea.sflag [#allocation10], %s2677
          %s2679 = sand.u32 %s173, 1
          %s2680 = smul.addr %s2679, 2
          %s2681 = scalar_lea.vmem [#allocation9], %s2680
          %2682 = dma.done %s2678, 32
        $region68: #{tpu_custom_call.1} parent=59 // pred_fallthru
          _
      $region60: #{tpu_custom_call.1} parent=5 // pred_fallthru
        _
    $region6: #{tpu_custom_call.1} parent=1 // loop_footer
      %s27 = sadd.s32 1, %s23
    $region7: #{tpu_custom_call.1} parent=1 // loop_footer_branch
      %22 = sbr.rel target = $region3
    $region8: #{tpu_custom_call.1} parent=1 // loop_exit
      _
    %2683 = vsyncpa [#allocation4], 1
    %s2684 = scalar_lea.sflag [#allocation4], 1
    %2685 = vsyncpa %s2684, 1
    %2686 = vsyncpa [#allocation7], 1
    %2687 = vsyncpa [#allocation5], 1
    %s2688 = scalar_lea.sflag [#allocation5], 1
    %2689 = vsyncpa %s2688, 1
    %2690 = vsyncpa [#allocation10], 1
    %s2691 = scalar_lea.sflag [#allocation10], 1
    %2692 = vsyncpa %s2691, 1

</llo_original>
